<compile_context>
chip_gen: v6e
topology: v6e:2x2x1
jax: 0.10.0
libtpu: 0.0.40
codegen_flags: <defaults>
</compile_context>

<pallas_src>
import jax
import jax.numpy as jnp
from jax.experimental import pallas as pl
from jax.experimental.pallas import tpu as pltpu


def _dwsep_kernel(wdw_ref, bdw_ref, wpw_ref, bpw_ref, x_ref, o_ref, xp_ref):
    """Fused depthwise-3x3(pad=1, groups=C_in) + pointwise-1x1 for one image.

    wdw_ref : SMEM (C_in*9,)      depthwise weights, flat index c*9 + kh*3 + kw
    bdw_ref : SMEM (C_in,)        depthwise bias
    wpw_ref : SMEM (C_out*C_in,)  pointwise weights, flat index co*C_in + ci
    bpw_ref : SMEM (C_out,)       pointwise bias
    x_ref   : VMEM (1, C_in, H, W)
    o_ref   : VMEM (1, C_out, H, W)
    xp_ref  : VMEM (C_in, H+2, W+2) scratch: zero-padded copy of the image
    """
    C_in = x_ref.shape[1]
    C_out = o_ref.shape[1]
    H = x_ref.shape[2]
    W = x_ref.shape[3]

    # Build the zero-padded (halo = 1) image in VMEM scratch: no HBM traffic.
    xp_ref[...] = jnp.zeros_like(xp_ref)
    xp_ref[:, 1:H + 1, 1:W + 1] = x_ref[0].astype(jnp.float32)

    # Depthwise 3x3: 9 scalar-broadcast VPU FMAs per input channel.
    # (Channel counts are tiny, so everything is statically unrolled; for big
    #  channel counts you would switch to a (HW, C) layout and jnp.dot.)
    dw_imgs = []
    for c in range(C_in):
        acc = jnp.zeros((H, W), jnp.float32) + bdw_ref[c]
        for kh in range(3):
            for kw in range(3):
                w = wdw_ref[c * 9 + kh * 3 + kw]
                acc = acc + xp_ref[c, kh:kh + H, kw:kw + W] * w
        dw_imgs.append(acc)

    # Pointwise 1x1: C_out * C_in scalar-broadcast VPU FMAs (MXU skipped).
    for co in range(C_out):
        acc = jnp.zeros((H, W), jnp.float32) + bpw_ref[co]
        for ci in range(C_in):
            acc = acc + dw_imgs[ci] * wpw_ref[co * C_in + ci]
        o_ref[0, co] = acc.astype(o_ref.dtype)


def depthwise_conv(x, w_dw, b_dw, w_pw, b_pw):
    """Forward pass of the PyTorch DepthwiseConv module.

    x    : (N, C_in, H, W) float32 (NCHW, kept as-is — no layout transposes)
    w_dw : (C_in, 3, 3)   depthwise weight (PyTorch (C_in, 1, 3, 3) squeezed)
    b_dw : (C_in,)
    w_pw : (C_out, C_in)  pointwise weight (PyTorch (C_out, C_in, 1, 1) squeezed)
    b_pw : (C_out,)
    returns (N, C_out, H, W) float32
    """
    N, C_in, H, W = x.shape
    C_out = w_pw.shape[0]

    # Flatten the tiny filter banks to 1-D so they live cheaply in SMEM and are
    # consumed as broadcast scalars (avoids narrow-lane VMEM weight tiles).
    wdw_flat = w_dw.reshape(C_in * 9).astype(jnp.float32)
    bdw_flat = b_dw.reshape(C_in).astype(jnp.float32)
    wpw_flat = w_pw.reshape(C_out * C_in).astype(jnp.float32)
    bpw_flat = b_pw.reshape(C_out).astype(jnp.float32)

    flops = 2 * N * H * W * (C_in * 9 + C_in * C_out)
    bytes_accessed = 4 * (N * C_in * H * W + N * C_out * H * W
                          + wdw_flat.size + bdw_flat.size
                          + wpw_flat.size + bpw_flat.size)

    return pl.pallas_call(
        _dwsep_kernel,
        out_shape=jax.ShapeDtypeStruct((N, C_out, H, W), jnp.float32),
        grid=(N,),
        in_specs=[
            pl.BlockSpec(memory_space=pltpu.MemorySpace.SMEM),      # w_dw
            pl.BlockSpec(memory_space=pltpu.MemorySpace.SMEM),      # b_dw
            pl.BlockSpec(memory_space=pltpu.MemorySpace.SMEM),      # w_pw
            pl.BlockSpec(memory_space=pltpu.MemorySpace.SMEM),      # b_pw
            pl.BlockSpec((1, C_in, H, W), lambda n: (n, 0, 0, 0)),  # x
        ],
        out_specs=pl.BlockSpec((1, C_out, H, W), lambda n: (n, 0, 0, 0)),
        scratch_shapes=[pltpu.VMEM((C_in, H + 2, W + 2), jnp.float32)],
        compiler_params=pltpu.CompilerParams(
            dimension_semantics=("parallel",)),
        cost_estimate=pl.CostEstimate(
            flops=flops, transcendentals=0, bytes_accessed=bytes_accessed),
    )(wdw_flat, bdw_flat, wpw_flat, bpw_flat, x.astype(jnp.float32))


def init_params(key, in_channels, out_channels):
    """Deterministic init mimicking nn.Conv2d defaults (U[-1/sqrt(fan_in), ...])."""
    k1, k2, k3, k4 = jax.random.split(key, 4)
    # depthwise: groups=C_in -> fan_in = 1 * 3 * 3
    bound_dw = 1.0 / jnp.sqrt(9.0)
    w_dw = jax.random.uniform(k1, (in_channels, 3, 3), jnp.float32,
                              -bound_dw, bound_dw)
    b_dw = jax.random.uniform(k2, (in_channels,), jnp.float32,
                              -bound_dw, bound_dw)
    # pointwise: fan_in = C_in * 1 * 1
    bound_pw = 1.0 / jnp.sqrt(float(in_channels))
    w_pw = jax.random.uniform(k3, (out_channels, in_channels), jnp.float32,
                              -bound_pw, bound_pw)
    b_pw = jax.random.uniform(k4, (out_channels,), jnp.float32,
                              -bound_pw, bound_pw)
    return w_dw, b_dw, w_pw, b_pw


if __name__ == "__main__":
    key = jax.random.PRNGKey(0)
    k_x, k_p = jax.random.split(key)

    N, C_in, H, W = 2, 4, 16, 16
    C_out = 8

    x = jax.random.normal(k_x, (N, C_in, H, W), jnp.float32)
    w_dw, b_dw, w_pw, b_pw = init_params(k_p, C_in, C_out)

    y = depthwise_conv(x, w_dw, b_dw, w_pw, b_pw)
    y = jax.block_until_ready(y)

    # Pure-JAX reference: depthwise 3x3 (pad=1, groups=C_in) via explicit
    # shifts, then pointwise 1x1 — same math as the PyTorch module.
    xp = jnp.pad(x, ((0, 0), (0, 0), (1, 1), (1, 1)))
    y_dw = b_dw[None, :, None, None] + sum(
        xp[:, :, kh:kh + H, kw:kw + W] * w_dw[:, kh, kw][None, :, None, None]
        for kh in range(3) for kw in range(3))
    y_ref = jnp.einsum("nchw,oc->nohw", y_dw, w_pw,
                       precision=jax.lax.Precision.HIGHEST)
    y_ref = y_ref + b_pw[None, :, None, None]

    assert y.shape == (N, C_out, H, W)
    assert jnp.allclose(y, y_ref, atol=1e-4, rtol=1e-4), \
        float(jnp.max(jnp.abs(y - y_ref)))

    print("KERNEL_OK")
</pallas_src>

<mosaic_0001>
module attributes {stable_mosaic.version = 11 : i64} {
  func.func @_dwsep_kernel(%arg0: i32, %arg1: memref<36xf32, #tpu.memory_space<smem>>, %arg2: memref<4xf32, #tpu.memory_space<smem>>, %arg3: memref<32xf32, #tpu.memory_space<smem>>, %arg4: memref<8xf32, #tpu.memory_space<smem>>, %arg5: memref<1x4x16x16xf32, #tpu.memory_space<vmem>>, %arg6: memref<1x8x16x16xf32, #tpu.memory_space<vmem>>, %arg7: memref<4x18x18xf32, #tpu.memory_space<vmem>>) attributes {dimension_semantics = [#tpu.dimension_semantics<parallel>], iteration_bounds = array<i64: 2>, scalar_prefetch = 0 : i64, scratch_operands = 1 : i64, tpu.core_type = #tpu.core_type<tc>, window_params = [{transform_indices = @transform_0, window_bounds = array<i64: 36>}, {transform_indices = @transform_1, window_bounds = array<i64: 4>}, {transform_indices = @transform_2, window_bounds = array<i64: 32>}, {transform_indices = @transform_3, window_bounds = array<i64: 8>}, {transform_indices = @transform_4, window_bounds = array<i64: 1, 4, 16, 16>}, {transform_indices = @transform_5, window_bounds = array<i64: 1, 8, 16, 16>}]} {
    %cst = arith.constant 0.000000e+00 : f32
    %0 = vector.broadcast %cst : f32 to vector<4x18x18xf32>
    %c0 = arith.constant 0 : index
    %c0_0 = arith.constant 0 : index
    %c0_1 = arith.constant 0 : index
    %1 = vector.load %arg7[%c0, %c0_0, %c0_1] : memref<4x18x18xf32, #tpu.memory_space<vmem>>, vector<4x18x18xf32>
    tpu.vector_store %arg7[%c0, %c0_0, %c0_1], %0 {strides = array<i32>} : memref<4x18x18xf32, #tpu.memory_space<vmem>>, vector<4x18x18xf32>,
    %c0_2 = arith.constant 0 : index
    %c0_3 = arith.constant 0 : index
    %c0_4 = arith.constant 0 : index
    %c0_5 = arith.constant 0 : index
    %2 = vector.load %arg5[%c0_2, %c0_3, %c0_4, %c0_5] : memref<1x4x16x16xf32, #tpu.memory_space<vmem>>, vector<1x4x16x16xf32>
    %3 = vector.shape_cast %2 : vector<1x4x16x16xf32> to vector<4x16x16xf32>
    %c0_6 = arith.constant 0 : index
    %c1 = arith.constant 1 : index
    %c1_7 = arith.constant 1 : index
    %4 = vector.load %arg7[%c0_6, %c1, %c1_7] : memref<4x18x18xf32, #tpu.memory_space<vmem>>, vector<4x16x16xf32>
    tpu.vector_store %arg7[%c0_6, %c1, %c1_7], %3 {strides = array<i32>} : memref<4x18x18xf32, #tpu.memory_space<vmem>>, vector<4x16x16xf32>,
    %cst_8 = arith.constant 0.000000e+00 : f32
    %5 = vector.broadcast %cst_8 : f32 to vector<16x16xf32>
    %c0_9 = arith.constant 0 : index
    %6 = memref.load %arg2[%c0_9] : memref<4xf32, #tpu.memory_space<smem>>
    %7 = vector.broadcast %6 : f32 to vector<16x16xf32>
    %8 = arith.addf %5, %7 : vector<16x16xf32>
    %c0_10 = arith.constant 0 : index
    %9 = memref.load %arg1[%c0_10] : memref<36xf32, #tpu.memory_space<smem>>
    %c0_11 = arith.constant 0 : index
    %c0_12 = arith.constant 0 : index
    %c0_13 = arith.constant 0 : index
    %10 = vector.load %arg7[%c0_11, %c0_12, %c0_13] : memref<4x18x18xf32, #tpu.memory_space<vmem>>, vector<1x16x16xf32>
    %11 = vector.shape_cast %10 : vector<1x16x16xf32> to vector<16x16xf32>
    %12 = vector.broadcast %9 : f32 to vector<16x16xf32>
    %13 = arith.mulf %11, %12 : vector<16x16xf32>
    %14 = arith.addf %8, %13 : vector<16x16xf32>
    %c1_14 = arith.constant 1 : index
    %15 = memref.load %arg1[%c1_14] : memref<36xf32, #tpu.memory_space<smem>>
    %c0_15 = arith.constant 0 : index
    %c0_16 = arith.constant 0 : index
    %c1_17 = arith.constant 1 : index
    %16 = vector.load %arg7[%c0_15, %c0_16, %c1_17] : memref<4x18x18xf32, #tpu.memory_space<vmem>>, vector<1x16x16xf32>
    %17 = vector.shape_cast %16 : vector<1x16x16xf32> to vector<16x16xf32>
    %18 = vector.broadcast %15 : f32 to vector<16x16xf32>
    %19 = arith.mulf %17, %18 : vector<16x16xf32>
    %20 = arith.addf %14, %19 : vector<16x16xf32>
    %c2 = arith.constant 2 : index
    %21 = memref.load %arg1[%c2] : memref<36xf32, #tpu.memory_space<smem>>
    %c0_18 = arith.constant 0 : index
    %c0_19 = arith.constant 0 : index
    %c2_20 = arith.constant 2 : index
    %22 = vector.load %arg7[%c0_18, %c0_19, %c2_20] : memref<4x18x18xf32, #tpu.memory_space<vmem>>, vector<1x16x16xf32>
    %23 = vector.shape_cast %22 : vector<1x16x16xf32> to vector<16x16xf32>
    %24 = vector.broadcast %21 : f32 to vector<16x16xf32>
    %25 = arith.mulf %23, %24 : vector<16x16xf32>
    %26 = arith.addf %20, %25 : vector<16x16xf32>
    %c3 = arith.constant 3 : index
    %27 = memref.load %arg1[%c3] : memref<36xf32, #tpu.memory_space<smem>>
    %c0_21 = arith.constant 0 : index
    %c1_22 = arith.constant 1 : index
    %c0_23 = arith.constant 0 : index
    %28 = vector.load %arg7[%c0_21, %c1_22, %c0_23] : memref<4x18x18xf32, #tpu.memory_space<vmem>>, vector<1x16x16xf32>
    %29 = vector.shape_cast %28 : vector<1x16x16xf32> to vector<16x16xf32>
    %30 = vector.broadcast %27 : f32 to vector<16x16xf32>
    %31 = arith.mulf %29, %30 : vector<16x16xf32>
    %32 = arith.addf %26, %31 : vector<16x16xf32>
    %c4 = arith.constant 4 : index
    %33 = memref.load %arg1[%c4] : memref<36xf32, #tpu.memory_space<smem>>
    %c0_24 = arith.constant 0 : index
    %c1_25 = arith.constant 1 : index
    %c1_26 = arith.constant 1 : index
    %34 = vector.load %arg7[%c0_24, %c1_25, %c1_26] : memref<4x18x18xf32, #tpu.memory_space<vmem>>, vector<1x16x16xf32>
    %35 = vector.shape_cast %34 : vector<1x16x16xf32> to vector<16x16xf32>
    %36 = vector.broadcast %33 : f32 to vector<16x16xf32>
    %37 = arith.mulf %35, %36 : vector<16x16xf32>
    %38 = arith.addf %32, %37 : vector<16x16xf32>
    %c5 = arith.constant 5 : index
    %39 = memref.load %arg1[%c5] : memref<36xf32, #tpu.memory_space<smem>>
    %c0_27 = arith.constant 0 : index
    %c1_28 = arith.constant 1 : index
    %c2_29 = arith.constant 2 : index
    %40 = vector.load %arg7[%c0_27, %c1_28, %c2_29] : memref<4x18x18xf32, #tpu.memory_space<vmem>>, vector<1x16x16xf32>
    %41 = vector.shape_cast %40 : vector<1x16x16xf32> to vector<16x16xf32>
    %42 = vector.broadcast %39 : f32 to vector<16x16xf32>
    %43 = arith.mulf %41, %42 : vector<16x16xf32>
    %44 = arith.addf %38, %43 : vector<16x16xf32>
    %c6 = arith.constant 6 : index
    %45 = memref.load %arg1[%c6] : memref<36xf32, #tpu.memory_space<smem>>
    %c0_30 = arith.constant 0 : index
    %c2_31 = arith.constant 2 : index
    %c0_32 = arith.constant 0 : index
    %46 = vector.load %arg7[%c0_30, %c2_31, %c0_32] : memref<4x18x18xf32, #tpu.memory_space<vmem>>, vector<1x16x16xf32>
    %47 = vector.shape_cast %46 : vector<1x16x16xf32> to vector<16x16xf32>
    %48 = vector.broadcast %45 : f32 to vector<16x16xf32>
    %49 = arith.mulf %47, %48 : vector<16x16xf32>
    %50 = arith.addf %44, %49 : vector<16x16xf32>
    %c7 = arith.constant 7 : index
    %51 = memref.load %arg1[%c7] : memref<36xf32, #tpu.memory_space<smem>>
    %c0_33 = arith.constant 0 : index
    %c2_34 = arith.constant 2 : index
    %c1_35 = arith.constant 1 : index
    %52 = vector.load %arg7[%c0_33, %c2_34, %c1_35] : memref<4x18x18xf32, #tpu.memory_space<vmem>>, vector<1x16x16xf32>
    %53 = vector.shape_cast %52 : vector<1x16x16xf32> to vector<16x16xf32>
    %54 = vector.broadcast %51 : f32 to vector<16x16xf32>
    %55 = arith.mulf %53, %54 : vector<16x16xf32>
    %56 = arith.addf %50, %55 : vector<16x16xf32>
    %c8 = arith.constant 8 : index
    %57 = memref.load %arg1[%c8] : memref<36xf32, #tpu.memory_space<smem>>
    %c0_36 = arith.constant 0 : index
    %c2_37 = arith.constant 2 : index
    %c2_38 = arith.constant 2 : index
    %58 = vector.load %arg7[%c0_36, %c2_37, %c2_38] : memref<4x18x18xf32, #tpu.memory_space<vmem>>, vector<1x16x16xf32>
    %59 = vector.shape_cast %58 : vector<1x16x16xf32> to vector<16x16xf32>
    %60 = vector.broadcast %57 : f32 to vector<16x16xf32>
    %61 = arith.mulf %59, %60 : vector<16x16xf32>
    %62 = arith.addf %56, %61 : vector<16x16xf32>
    %cst_39 = arith.constant 0.000000e+00 : f32
    %63 = vector.broadcast %cst_39 : f32 to vector<16x16xf32>
    %c1_40 = arith.constant 1 : index
    %64 = memref.load %arg2[%c1_40] : memref<4xf32, #tpu.memory_space<smem>>
    %65 = vector.broadcast %64 : f32 to vector<16x16xf32>
    %66 = arith.addf %63, %65 : vector<16x16xf32>
    %c9 = arith.constant 9 : index
    %67 = memref.load %arg1[%c9] : memref<36xf32, #tpu.memory_space<smem>>
    %c1_41 = arith.constant 1 : index
    %c0_42 = arith.constant 0 : index
    %c0_43 = arith.constant 0 : index
    %68 = vector.load %arg7[%c1_41, %c0_42, %c0_43] : memref<4x18x18xf32, #tpu.memory_space<vmem>>, vector<1x16x16xf32>
    %69 = vector.shape_cast %68 : vector<1x16x16xf32> to vector<16x16xf32>
    %70 = vector.broadcast %67 : f32 to vector<16x16xf32>
    %71 = arith.mulf %69, %70 : vector<16x16xf32>
    %72 = arith.addf %66, %71 : vector<16x16xf32>
    %c10 = arith.constant 10 : index
    %73 = memref.load %arg1[%c10] : memref<36xf32, #tpu.memory_space<smem>>
    %c1_44 = arith.constant 1 : index
    %c0_45 = arith.constant 0 : index
    %c1_46 = arith.constant 1 : index
    %74 = vector.load %arg7[%c1_44, %c0_45, %c1_46] : memref<4x18x18xf32, #tpu.memory_space<vmem>>, vector<1x16x16xf32>
    %75 = vector.shape_cast %74 : vector<1x16x16xf32> to vector<16x16xf32>
    %76 = vector.broadcast %73 : f32 to vector<16x16xf32>
    %77 = arith.mulf %75, %76 : vector<16x16xf32>
    %78 = arith.addf %72, %77 : vector<16x16xf32>
    %c11 = arith.constant 11 : index
    %79 = memref.load %arg1[%c11] : memref<36xf32, #tpu.memory_space<smem>>
    %c1_47 = arith.constant 1 : index
    %c0_48 = arith.constant 0 : index
    %c2_49 = arith.constant 2 : index
    %80 = vector.load %arg7[%c1_47, %c0_48, %c2_49] : memref<4x18x18xf32, #tpu.memory_space<vmem>>, vector<1x16x16xf32>
    %81 = vector.shape_cast %80 : vector<1x16x16xf32> to vector<16x16xf32>
    %82 = vector.broadcast %79 : f32 to vector<16x16xf32>
    %83 = arith.mulf %81, %82 : vector<16x16xf32>
    %84 = arith.addf %78, %83 : vector<16x16xf32>
    %c12 = arith.constant 12 : index
    %85 = memref.load %arg1[%c12] : memref<36xf32, #tpu.memory_space<smem>>
    %c1_50 = arith.constant 1 : index
    %c1_51 = arith.constant 1 : index
    %c0_52 = arith.constant 0 : index
    %86 = vector.load %arg7[%c1_50, %c1_51, %c0_52] : memref<4x18x18xf32, #tpu.memory_space<vmem>>, vector<1x16x16xf32>
    %87 = vector.shape_cast %86 : vector<1x16x16xf32> to vector<16x16xf32>
    %88 = vector.broadcast %85 : f32 to vector<16x16xf32>
    %89 = arith.mulf %87, %88 : vector<16x16xf32>
    %90 = arith.addf %84, %89 : vector<16x16xf32>
    %c13 = arith.constant 13 : index
    %91 = memref.load %arg1[%c13] : memref<36xf32, #tpu.memory_space<smem>>
    %c1_53 = arith.constant 1 : index
    %c1_54 = arith.constant 1 : index
    %c1_55 = arith.constant 1 : index
    %92 = vector.load %arg7[%c1_53, %c1_54, %c1_55] : memref<4x18x18xf32, #tpu.memory_space<vmem>>, vector<1x16x16xf32>
    %93 = vector.shape_cast %92 : vector<1x16x16xf32> to vector<16x16xf32>
    %94 = vector.broadcast %91 : f32 to vector<16x16xf32>
    %95 = arith.mulf %93, %94 : vector<16x16xf32>
    %96 = arith.addf %90, %95 : vector<16x16xf32>
    %c14 = arith.constant 14 : index
    %97 = memref.load %arg1[%c14] : memref<36xf32, #tpu.memory_space<smem>>
    %c1_56 = arith.constant 1 : index
    %c1_57 = arith.constant 1 : index
    %c2_58 = arith.constant 2 : index
    %98 = vector.load %arg7[%c1_56, %c1_57, %c2_58] : memref<4x18x18xf32, #tpu.memory_space<vmem>>, vector<1x16x16xf32>
    %99 = vector.shape_cast %98 : vector<1x16x16xf32> to vector<16x16xf32>
    %100 = vector.broadcast %97 : f32 to vector<16x16xf32>
    %101 = arith.mulf %99, %100 : vector<16x16xf32>
    %102 = arith.addf %96, %101 : vector<16x16xf32>
    %c15 = arith.constant 15 : index
    %103 = memref.load %arg1[%c15] : memref<36xf32, #tpu.memory_space<smem>>
    %c1_59 = arith.constant 1 : index
    %c2_60 = arith.constant 2 : index
    %c0_61 = arith.constant 0 : index
    %104 = vector.load %arg7[%c1_59, %c2_60, %c0_61] : memref<4x18x18xf32, #tpu.memory_space<vmem>>, vector<1x16x16xf32>
    %105 = vector.shape_cast %104 : vector<1x16x16xf32> to vector<16x16xf32>
    %106 = vector.broadcast %103 : f32 to vector<16x16xf32>
    %107 = arith.mulf %105, %106 : vector<16x16xf32>
    %108 = arith.addf %102, %107 : vector<16x16xf32>
    %c16 = arith.constant 16 : index
    %109 = memref.load %arg1[%c16] : memref<36xf32, #tpu.memory_space<smem>>
    %c1_62 = arith.constant 1 : index
    %c2_63 = arith.constant 2 : index
    %c1_64 = arith.constant 1 : index
    %110 = vector.load %arg7[%c1_62, %c2_63, %c1_64] : memref<4x18x18xf32, #tpu.memory_space<vmem>>, vector<1x16x16xf32>
    %111 = vector.shape_cast %110 : vector<1x16x16xf32> to vector<16x16xf32>
    %112 = vector.broadcast %109 : f32 to vector<16x16xf32>
    %113 = arith.mulf %111, %112 : vector<16x16xf32>
    %114 = arith.addf %108, %113 : vector<16x16xf32>
    %c17 = arith.constant 17 : index
    %115 = memref.load %arg1[%c17] : memref<36xf32, #tpu.memory_space<smem>>
    %c1_65 = arith.constant 1 : index
    %c2_66 = arith.constant 2 : index
    %c2_67 = arith.constant 2 : index
    %116 = vector.load %arg7[%c1_65, %c2_66, %c2_67] : memref<4x18x18xf32, #tpu.memory_space<vmem>>, vector<1x16x16xf32>
    %117 = vector.shape_cast %116 : vector<1x16x16xf32> to vector<16x16xf32>
    %118 = vector.broadcast %115 : f32 to vector<16x16xf32>
    %119 = arith.mulf %117, %118 : vector<16x16xf32>
    %120 = arith.addf %114, %119 : vector<16x16xf32>
    %cst_68 = arith.constant 0.000000e+00 : f32
    %121 = vector.broadcast %cst_68 : f32 to vector<16x16xf32>
    %c2_69 = arith.constant 2 : index
    %122 = memref.load %arg2[%c2_69] : memref<4xf32, #tpu.memory_space<smem>>
    %123 = vector.broadcast %122 : f32 to vector<16x16xf32>
    %124 = arith.addf %121, %123 : vector<16x16xf32>
    %c18 = arith.constant 18 : index
    %125 = memref.load %arg1[%c18] : memref<36xf32, #tpu.memory_space<smem>>
    %c2_70 = arith.constant 2 : index
    %c0_71 = arith.constant 0 : index
    %c0_72 = arith.constant 0 : index
    %126 = vector.load %arg7[%c2_70, %c0_71, %c0_72] : memref<4x18x18xf32, #tpu.memory_space<vmem>>, vector<1x16x16xf32>
    %127 = vector.shape_cast %126 : vector<1x16x16xf32> to vector<16x16xf32>
    %128 = vector.broadcast %125 : f32 to vector<16x16xf32>
    %129 = arith.mulf %127, %128 : vector<16x16xf32>
    %130 = arith.addf %124, %129 : vector<16x16xf32>
    %c19 = arith.constant 19 : index
    %131 = memref.load %arg1[%c19] : memref<36xf32, #tpu.memory_space<smem>>
    %c2_73 = arith.constant 2 : index
    %c0_74 = arith.constant 0 : index
    %c1_75 = arith.constant 1 : index
    %132 = vector.load %arg7[%c2_73, %c0_74, %c1_75] : memref<4x18x18xf32, #tpu.memory_space<vmem>>, vector<1x16x16xf32>
    %133 = vector.shape_cast %132 : vector<1x16x16xf32> to vector<16x16xf32>
    %134 = vector.broadcast %131 : f32 to vector<16x16xf32>
    %135 = arith.mulf %133, %134 : vector<16x16xf32>
    %136 = arith.addf %130, %135 : vector<16x16xf32>
    %c20 = arith.constant 20 : index
    %137 = memref.load %arg1[%c20] : memref<36xf32, #tpu.memory_space<smem>>
    %c2_76 = arith.constant 2 : index
    %c0_77 = arith.constant 0 : index
    %c2_78 = arith.constant 2 : index
    %138 = vector.load %arg7[%c2_76, %c0_77, %c2_78] : memref<4x18x18xf32, #tpu.memory_space<vmem>>, vector<1x16x16xf32>
    %139 = vector.shape_cast %138 : vector<1x16x16xf32> to vector<16x16xf32>
    %140 = vector.broadcast %137 : f32 to vector<16x16xf32>
    %141 = arith.mulf %139, %140 : vector<16x16xf32>
    %142 = arith.addf %136, %141 : vector<16x16xf32>
    %c21 = arith.constant 21 : index
    %143 = memref.load %arg1[%c21] : memref<36xf32, #tpu.memory_space<smem>>
    %c2_79 = arith.constant 2 : index
    %c1_80 = arith.constant 1 : index
    %c0_81 = arith.constant 0 : index
    %144 = vector.load %arg7[%c2_79, %c1_80, %c0_81] : memref<4x18x18xf32, #tpu.memory_space<vmem>>, vector<1x16x16xf32>
    %145 = vector.shape_cast %144 : vector<1x16x16xf32> to vector<16x16xf32>
    %146 = vector.broadcast %143 : f32 to vector<16x16xf32>
    %147 = arith.mulf %145, %146 : vector<16x16xf32>
    %148 = arith.addf %142, %147 : vector<16x16xf32>
    %c22 = arith.constant 22 : index
    %149 = memref.load %arg1[%c22] : memref<36xf32, #tpu.memory_space<smem>>
    %c2_82 = arith.constant 2 : index
    %c1_83 = arith.constant 1 : index
    %c1_84 = arith.constant 1 : index
    %150 = vector.load %arg7[%c2_82, %c1_83, %c1_84] : memref<4x18x18xf32, #tpu.memory_space<vmem>>, vector<1x16x16xf32>
    %151 = vector.shape_cast %150 : vector<1x16x16xf32> to vector<16x16xf32>
    %152 = vector.broadcast %149 : f32 to vector<16x16xf32>
    %153 = arith.mulf %151, %152 : vector<16x16xf32>
    %154 = arith.addf %148, %153 : vector<16x16xf32>
    %c23 = arith.constant 23 : index
    %155 = memref.load %arg1[%c23] : memref<36xf32, #tpu.memory_space<smem>>
    %c2_85 = arith.constant 2 : index
    %c1_86 = arith.constant 1 : index
    %c2_87 = arith.constant 2 : index
    %156 = vector.load %arg7[%c2_85, %c1_86, %c2_87] : memref<4x18x18xf32, #tpu.memory_space<vmem>>, vector<1x16x16xf32>
    %157 = vector.shape_cast %156 : vector<1x16x16xf32> to vector<16x16xf32>
    %158 = vector.broadcast %155 : f32 to vector<16x16xf32>
    %159 = arith.mulf %157, %158 : vector<16x16xf32>
    %160 = arith.addf %154, %159 : vector<16x16xf32>
    %c24 = arith.constant 24 : index
    %161 = memref.load %arg1[%c24] : memref<36xf32, #tpu.memory_space<smem>>
    %c2_88 = arith.constant 2 : index
    %c2_89 = arith.constant 2 : index
    %c0_90 = arith.constant 0 : index
    %162 = vector.load %arg7[%c2_88, %c2_89, %c0_90] : memref<4x18x18xf32, #tpu.memory_space<vmem>>, vector<1x16x16xf32>
    %163 = vector.shape_cast %162 : vector<1x16x16xf32> to vector<16x16xf32>
    %164 = vector.broadcast %161 : f32 to vector<16x16xf32>
    %165 = arith.mulf %163, %164 : vector<16x16xf32>
    %166 = arith.addf %160, %165 : vector<16x16xf32>
    %c25 = arith.constant 25 : index
    %167 = memref.load %arg1[%c25] : memref<36xf32, #tpu.memory_space<smem>>
    %c2_91 = arith.constant 2 : index
    %c2_92 = arith.constant 2 : index
    %c1_93 = arith.constant 1 : index
    %168 = vector.load %arg7[%c2_91, %c2_92, %c1_93] : memref<4x18x18xf32, #tpu.memory_space<vmem>>, vector<1x16x16xf32>
    %169 = vector.shape_cast %168 : vector<1x16x16xf32> to vector<16x16xf32>
    %170 = vector.broadcast %167 : f32 to vector<16x16xf32>
    %171 = arith.mulf %169, %170 : vector<16x16xf32>
    %172 = arith.addf %166, %171 : vector<16x16xf32>
    %c26 = arith.constant 26 : index
    %173 = memref.load %arg1[%c26] : memref<36xf32, #tpu.memory_space<smem>>
    %c2_94 = arith.constant 2 : index
    %c2_95 = arith.constant 2 : index
    %c2_96 = arith.constant 2 : index
    %174 = vector.load %arg7[%c2_94, %c2_95, %c2_96] : memref<4x18x18xf32, #tpu.memory_space<vmem>>, vector<1x16x16xf32>
    %175 = vector.shape_cast %174 : vector<1x16x16xf32> to vector<16x16xf32>
    %176 = vector.broadcast %173 : f32 to vector<16x16xf32>
    %177 = arith.mulf %175, %176 : vector<16x16xf32>
    %178 = arith.addf %172, %177 : vector<16x16xf32>
    %cst_97 = arith.constant 0.000000e+00 : f32
    %179 = vector.broadcast %cst_97 : f32 to vector<16x16xf32>
    %c3_98 = arith.constant 3 : index
    %180 = memref.load %arg2[%c3_98] : memref<4xf32, #tpu.memory_space<smem>>
    %181 = vector.broadcast %180 : f32 to vector<16x16xf32>
    %182 = arith.addf %179, %181 : vector<16x16xf32>
    %c27 = arith.constant 27 : index
    %183 = memref.load %arg1[%c27] : memref<36xf32, #tpu.memory_space<smem>>
    %c3_99 = arith.constant 3 : index
    %c0_100 = arith.constant 0 : index
    %c0_101 = arith.constant 0 : index
    %184 = vector.load %arg7[%c3_99, %c0_100, %c0_101] : memref<4x18x18xf32, #tpu.memory_space<vmem>>, vector<1x16x16xf32>
    %185 = vector.shape_cast %184 : vector<1x16x16xf32> to vector<16x16xf32>
    %186 = vector.broadcast %183 : f32 to vector<16x16xf32>
    %187 = arith.mulf %185, %186 : vector<16x16xf32>
    %188 = arith.addf %182, %187 : vector<16x16xf32>
    %c28 = arith.constant 28 : index
    %189 = memref.load %arg1[%c28] : memref<36xf32, #tpu.memory_space<smem>>
    %c3_102 = arith.constant 3 : index
    %c0_103 = arith.constant 0 : index
    %c1_104 = arith.constant 1 : index
    %190 = vector.load %arg7[%c3_102, %c0_103, %c1_104] : memref<4x18x18xf32, #tpu.memory_space<vmem>>, vector<1x16x16xf32>
    %191 = vector.shape_cast %190 : vector<1x16x16xf32> to vector<16x16xf32>
    %192 = vector.broadcast %189 : f32 to vector<16x16xf32>
    %193 = arith.mulf %191, %192 : vector<16x16xf32>
    %194 = arith.addf %188, %193 : vector<16x16xf32>
    %c29 = arith.constant 29 : index
    %195 = memref.load %arg1[%c29] : memref<36xf32, #tpu.memory_space<smem>>
    %c3_105 = arith.constant 3 : index
    %c0_106 = arith.constant 0 : index
    %c2_107 = arith.constant 2 : index
    %196 = vector.load %arg7[%c3_105, %c0_106, %c2_107] : memref<4x18x18xf32, #tpu.memory_space<vmem>>, vector<1x16x16xf32>
    %197 = vector.shape_cast %196 : vector<1x16x16xf32> to vector<16x16xf32>
    %198 = vector.broadcast %195 : f32 to vector<16x16xf32>
    %199 = arith.mulf %197, %198 : vector<16x16xf32>
    %200 = arith.addf %194, %199 : vector<16x16xf32>
    %c30 = arith.constant 30 : index
    %201 = memref.load %arg1[%c30] : memref<36xf32, #tpu.memory_space<smem>>
    %c3_108 = arith.constant 3 : index
    %c1_109 = arith.constant 1 : index
    %c0_110 = arith.constant 0 : index
    %202 = vector.load %arg7[%c3_108, %c1_109, %c0_110] : memref<4x18x18xf32, #tpu.memory_space<vmem>>, vector<1x16x16xf32>
    %203 = vector.shape_cast %202 : vector<1x16x16xf32> to vector<16x16xf32>
    %204 = vector.broadcast %201 : f32 to vector<16x16xf32>
    %205 = arith.mulf %203, %204 : vector<16x16xf32>
    %206 = arith.addf %200, %205 : vector<16x16xf32>
    %c31 = arith.constant 31 : index
    %207 = memref.load %arg1[%c31] : memref<36xf32, #tpu.memory_space<smem>>
    %c3_111 = arith.constant 3 : index
    %c1_112 = arith.constant 1 : index
    %c1_113 = arith.constant 1 : index
    %208 = vector.load %arg7[%c3_111, %c1_112, %c1_113] : memref<4x18x18xf32, #tpu.memory_space<vmem>>, vector<1x16x16xf32>
    %209 = vector.shape_cast %208 : vector<1x16x16xf32> to vector<16x16xf32>
    %210 = vector.broadcast %207 : f32 to vector<16x16xf32>
    %211 = arith.mulf %209, %210 : vector<16x16xf32>
    %212 = arith.addf %206, %211 : vector<16x16xf32>
    %c32 = arith.constant 32 : index
    %213 = memref.load %arg1[%c32] : memref<36xf32, #tpu.memory_space<smem>>
    %c3_114 = arith.constant 3 : index
    %c1_115 = arith.constant 1 : index
    %c2_116 = arith.constant 2 : index
    %214 = vector.load %arg7[%c3_114, %c1_115, %c2_116] : memref<4x18x18xf32, #tpu.memory_space<vmem>>, vector<1x16x16xf32>
    %215 = vector.shape_cast %214 : vector<1x16x16xf32> to vector<16x16xf32>
    %216 = vector.broadcast %213 : f32 to vector<16x16xf32>
    %217 = arith.mulf %215, %216 : vector<16x16xf32>
    %218 = arith.addf %212, %217 : vector<16x16xf32>
    %c33 = arith.constant 33 : index
    %219 = memref.load %arg1[%c33] : memref<36xf32, #tpu.memory_space<smem>>
    %c3_117 = arith.constant 3 : index
    %c2_118 = arith.constant 2 : index
    %c0_119 = arith.constant 0 : index
    %220 = vector.load %arg7[%c3_117, %c2_118, %c0_119] : memref<4x18x18xf32, #tpu.memory_space<vmem>>, vector<1x16x16xf32>
    %221 = vector.shape_cast %220 : vector<1x16x16xf32> to vector<16x16xf32>
    %222 = vector.broadcast %219 : f32 to vector<16x16xf32>
    %223 = arith.mulf %221, %222 : vector<16x16xf32>
    %224 = arith.addf %218, %223 : vector<16x16xf32>
    %c34 = arith.constant 34 : index
    %225 = memref.load %arg1[%c34] : memref<36xf32, #tpu.memory_space<smem>>
    %c3_120 = arith.constant 3 : index
    %c2_121 = arith.constant 2 : index
    %c1_122 = arith.constant 1 : index
    %226 = vector.load %arg7[%c3_120, %c2_121, %c1_122] : memref<4x18x18xf32, #tpu.memory_space<vmem>>, vector<1x16x16xf32>
    %227 = vector.shape_cast %226 : vector<1x16x16xf32> to vector<16x16xf32>
    %228 = vector.broadcast %225 : f32 to vector<16x16xf32>
    %229 = arith.mulf %227, %228 : vector<16x16xf32>
    %230 = arith.addf %224, %229 : vector<16x16xf32>
    %c35 = arith.constant 35 : index
    %231 = memref.load %arg1[%c35] : memref<36xf32, #tpu.memory_space<smem>>
    %c3_123 = arith.constant 3 : index
    %c2_124 = arith.constant 2 : index
    %c2_125 = arith.constant 2 : index
    %232 = vector.load %arg7[%c3_123, %c2_124, %c2_125] : memref<4x18x18xf32, #tpu.memory_space<vmem>>, vector<1x16x16xf32>
    %233 = vector.shape_cast %232 : vector<1x16x16xf32> to vector<16x16xf32>
    %234 = vector.broadcast %231 : f32 to vector<16x16xf32>
    %235 = arith.mulf %233, %234 : vector<16x16xf32>
    %236 = arith.addf %230, %235 : vector<16x16xf32>
    %cst_126 = arith.constant 0.000000e+00 : f32
    %237 = vector.broadcast %cst_126 : f32 to vector<16x16xf32>
    %c0_127 = arith.constant 0 : index
    %238 = memref.load %arg4[%c0_127] : memref<8xf32, #tpu.memory_space<smem>>
    %239 = vector.broadcast %238 : f32 to vector<16x16xf32>
    %240 = arith.addf %237, %239 : vector<16x16xf32>
    %c0_128 = arith.constant 0 : index
    %241 = memref.load %arg3[%c0_128] : memref<32xf32, #tpu.memory_space<smem>>
    %242 = vector.broadcast %241 : f32 to vector<16x16xf32>
    %243 = arith.mulf %62, %242 : vector<16x16xf32>
    %244 = arith.addf %240, %243 : vector<16x16xf32>
    %c1_129 = arith.constant 1 : index
    %245 = memref.load %arg3[%c1_129] : memref<32xf32, #tpu.memory_space<smem>>
    %246 = vector.broadcast %245 : f32 to vector<16x16xf32>
    %247 = arith.mulf %120, %246 : vector<16x16xf32>
    %248 = arith.addf %244, %247 : vector<16x16xf32>
    %c2_130 = arith.constant 2 : index
    %249 = memref.load %arg3[%c2_130] : memref<32xf32, #tpu.memory_space<smem>>
    %250 = vector.broadcast %249 : f32 to vector<16x16xf32>
    %251 = arith.mulf %178, %250 : vector<16x16xf32>
    %252 = arith.addf %248, %251 : vector<16x16xf32>
    %c3_131 = arith.constant 3 : index
    %253 = memref.load %arg3[%c3_131] : memref<32xf32, #tpu.memory_space<smem>>
    %254 = vector.broadcast %253 : f32 to vector<16x16xf32>
    %255 = arith.mulf %236, %254 : vector<16x16xf32>
    %256 = arith.addf %252, %255 : vector<16x16xf32>
    %c0_132 = arith.constant 0 : index
    %c0_133 = arith.constant 0 : index
    %c0_134 = arith.constant 0 : index
    %c0_135 = arith.constant 0 : index
    %257 = vector.load %arg6[%c0_132, %c0_133, %c0_134, %c0_135] : memref<1x8x16x16xf32, #tpu.memory_space<vmem>>, vector<1x1x16x16xf32>
    %258 = vector.shape_cast %257 : vector<1x1x16x16xf32> to vector<16x16xf32>
    %259 = vector.shape_cast %256 : vector<16x16xf32> to vector<1x1x16x16xf32>
    tpu.vector_store %arg6[%c0_132, %c0_133, %c0_134, %c0_135], %259 {strides = array<i32>} : memref<1x8x16x16xf32, #tpu.memory_space<vmem>>, vector<1x1x16x16xf32>,
    %cst_136 = arith.constant 0.000000e+00 : f32
    %260 = vector.broadcast %cst_136 : f32 to vector<16x16xf32>
    %c1_137 = arith.constant 1 : index
    %261 = memref.load %arg4[%c1_137] : memref<8xf32, #tpu.memory_space<smem>>
    %262 = vector.broadcast %261 : f32 to vector<16x16xf32>
    %263 = arith.addf %260, %262 : vector<16x16xf32>
    %c4_138 = arith.constant 4 : index
    %264 = memref.load %arg3[%c4_138] : memref<32xf32, #tpu.memory_space<smem>>
    %265 = vector.broadcast %264 : f32 to vector<16x16xf32>
    %266 = arith.mulf %62, %265 : vector<16x16xf32>
    %267 = arith.addf %263, %266 : vector<16x16xf32>
    %c5_139 = arith.constant 5 : index
    %268 = memref.load %arg3[%c5_139] : memref<32xf32, #tpu.memory_space<smem>>
    %269 = vector.broadcast %268 : f32 to vector<16x16xf32>
    %270 = arith.mulf %120, %269 : vector<16x16xf32>
    %271 = arith.addf %267, %270 : vector<16x16xf32>
    %c6_140 = arith.constant 6 : index
    %272 = memref.load %arg3[%c6_140] : memref<32xf32, #tpu.memory_space<smem>>
    %273 = vector.broadcast %272 : f32 to vector<16x16xf32>
    %274 = arith.mulf %178, %273 : vector<16x16xf32>
    %275 = arith.addf %271, %274 : vector<16x16xf32>
    %c7_141 = arith.constant 7 : index
    %276 = memref.load %arg3[%c7_141] : memref<32xf32, #tpu.memory_space<smem>>
    %277 = vector.broadcast %276 : f32 to vector<16x16xf32>
    %278 = arith.mulf %236, %277 : vector<16x16xf32>
    %279 = arith.addf %275, %278 : vector<16x16xf32>
    %c0_142 = arith.constant 0 : index
    %c1_143 = arith.constant 1 : index
    %c0_144 = arith.constant 0 : index
    %c0_145 = arith.constant 0 : index
    %280 = vector.load %arg6[%c0_142, %c1_143, %c0_144, %c0_145] : memref<1x8x16x16xf32, #tpu.memory_space<vmem>>, vector<1x1x16x16xf32>
    %281 = vector.shape_cast %280 : vector<1x1x16x16xf32> to vector<16x16xf32>
    %282 = vector.shape_cast %279 : vector<16x16xf32> to vector<1x1x16x16xf32>
    tpu.vector_store %arg6[%c0_142, %c1_143, %c0_144, %c0_145], %282 {strides = array<i32>} : memref<1x8x16x16xf32, #tpu.memory_space<vmem>>, vector<1x1x16x16xf32>,
    %cst_146 = arith.constant 0.000000e+00 : f32
    %283 = vector.broadcast %cst_146 : f32 to vector<16x16xf32>
    %c2_147 = arith.constant 2 : index
    %284 = memref.load %arg4[%c2_147] : memref<8xf32, #tpu.memory_space<smem>>
    %285 = vector.broadcast %284 : f32 to vector<16x16xf32>
    %286 = arith.addf %283, %285 : vector<16x16xf32>
    %c8_148 = arith.constant 8 : index
    %287 = memref.load %arg3[%c8_148] : memref<32xf32, #tpu.memory_space<smem>>
    %288 = vector.broadcast %287 : f32 to vector<16x16xf32>
    %289 = arith.mulf %62, %288 : vector<16x16xf32>
    %290 = arith.addf %286, %289 : vector<16x16xf32>
    %c9_149 = arith.constant 9 : index
    %291 = memref.load %arg3[%c9_149] : memref<32xf32, #tpu.memory_space<smem>>
    %292 = vector.broadcast %291 : f32 to vector<16x16xf32>
    %293 = arith.mulf %120, %292 : vector<16x16xf32>
    %294 = arith.addf %290, %293 : vector<16x16xf32>
    %c10_150 = arith.constant 10 : index
    %295 = memref.load %arg3[%c10_150] : memref<32xf32, #tpu.memory_space<smem>>
    %296 = vector.broadcast %295 : f32 to vector<16x16xf32>
    %297 = arith.mulf %178, %296 : vector<16x16xf32>
    %298 = arith.addf %294, %297 : vector<16x16xf32>
    %c11_151 = arith.constant 11 : index
    %299 = memref.load %arg3[%c11_151] : memref<32xf32, #tpu.memory_space<smem>>
    %300 = vector.broadcast %299 : f32 to vector<16x16xf32>
    %301 = arith.mulf %236, %300 : vector<16x16xf32>
    %302 = arith.addf %298, %301 : vector<16x16xf32>
    %c0_152 = arith.constant 0 : index
    %c2_153 = arith.constant 2 : index
    %c0_154 = arith.constant 0 : index
    %c0_155 = arith.constant 0 : index
    %303 = vector.load %arg6[%c0_152, %c2_153, %c0_154, %c0_155] : memref<1x8x16x16xf32, #tpu.memory_space<vmem>>, vector<1x1x16x16xf32>
    %304 = vector.shape_cast %303 : vector<1x1x16x16xf32> to vector<16x16xf32>
    %305 = vector.shape_cast %302 : vector<16x16xf32> to vector<1x1x16x16xf32>
    tpu.vector_store %arg6[%c0_152, %c2_153, %c0_154, %c0_155], %305 {strides = array<i32>} : memref<1x8x16x16xf32, #tpu.memory_space<vmem>>, vector<1x1x16x16xf32>,
    %cst_156 = arith.constant 0.000000e+00 : f32
    %306 = vector.broadcast %cst_156 : f32 to vector<16x16xf32>
    %c3_157 = arith.constant 3 : index
    %307 = memref.load %arg4[%c3_157] : memref<8xf32, #tpu.memory_space<smem>>
    %308 = vector.broadcast %307 : f32 to vector<16x16xf32>
    %309 = arith.addf %306, %308 : vector<16x16xf32>
    %c12_158 = arith.constant 12 : index
    %310 = memref.load %arg3[%c12_158] : memref<32xf32, #tpu.memory_space<smem>>
    %311 = vector.broadcast %310 : f32 to vector<16x16xf32>
    %312 = arith.mulf %62, %311 : vector<16x16xf32>
    %313 = arith.addf %309, %312 : vector<16x16xf32>
    %c13_159 = arith.constant 13 : index
    %314 = memref.load %arg3[%c13_159] : memref<32xf32, #tpu.memory_space<smem>>
    %315 = vector.broadcast %314 : f32 to vector<16x16xf32>
    %316 = arith.mulf %120, %315 : vector<16x16xf32>
    %317 = arith.addf %313, %316 : vector<16x16xf32>
    %c14_160 = arith.constant 14 : index
    %318 = memref.load %arg3[%c14_160] : memref<32xf32, #tpu.memory_space<smem>>
    %319 = vector.broadcast %318 : f32 to vector<16x16xf32>
    %320 = arith.mulf %178, %319 : vector<16x16xf32>
    %321 = arith.addf %317, %320 : vector<16x16xf32>
    %c15_161 = arith.constant 15 : index
    %322 = memref.load %arg3[%c15_161] : memref<32xf32, #tpu.memory_space<smem>>
    %323 = vector.broadcast %322 : f32 to vector<16x16xf32>
    %324 = arith.mulf %236, %323 : vector<16x16xf32>
    %325 = arith.addf %321, %324 : vector<16x16xf32>
    %c0_162 = arith.constant 0 : index
    %c3_163 = arith.constant 3 : index
    %c0_164 = arith.constant 0 : index
    %c0_165 = arith.constant 0 : index
    %326 = vector.load %arg6[%c0_162, %c3_163, %c0_164, %c0_165] : memref<1x8x16x16xf32, #tpu.memory_space<vmem>>, vector<1x1x16x16xf32>
    %327 = vector.shape_cast %326 : vector<1x1x16x16xf32> to vector<16x16xf32>
    %328 = vector.shape_cast %325 : vector<16x16xf32> to vector<1x1x16x16xf32>
    tpu.vector_store %arg6[%c0_162, %c3_163, %c0_164, %c0_165], %328 {strides = array<i32>} : memref<1x8x16x16xf32, #tpu.memory_space<vmem>>, vector<1x1x16x16xf32>,
    %cst_166 = arith.constant 0.000000e+00 : f32
    %329 = vector.broadcast %cst_166 : f32 to vector<16x16xf32>
    %c4_167 = arith.constant 4 : index
    %330 = memref.load %arg4[%c4_167] : memref<8xf32, #tpu.memory_space<smem>>
    %331 = vector.broadcast %330 : f32 to vector<16x16xf32>
    %332 = arith.addf %329, %331 : vector<16x16xf32>
    %c16_168 = arith.constant 16 : index
    %333 = memref.load %arg3[%c16_168] : memref<32xf32, #tpu.memory_space<smem>>
    %334 = vector.broadcast %333 : f32 to vector<16x16xf32>
    %335 = arith.mulf %62, %334 : vector<16x16xf32>
    %336 = arith.addf %332, %335 : vector<16x16xf32>
    %c17_169 = arith.constant 17 : index
    %337 = memref.load %arg3[%c17_169] : memref<32xf32, #tpu.memory_space<smem>>
    %338 = vector.broadcast %337 : f32 to vector<16x16xf32>
    %339 = arith.mulf %120, %338 : vector<16x16xf32>
    %340 = arith.addf %336, %339 : vector<16x16xf32>
    %c18_170 = arith.constant 18 : index
    %341 = memref.load %arg3[%c18_170] : memref<32xf32, #tpu.memory_space<smem>>
    %342 = vector.broadcast %341 : f32 to vector<16x16xf32>
    %343 = arith.mulf %178, %342 : vector<16x16xf32>
    %344 = arith.addf %340, %343 : vector<16x16xf32>
    %c19_171 = arith.constant 19 : index
    %345 = memref.load %arg3[%c19_171] : memref<32xf32, #tpu.memory_space<smem>>
    %346 = vector.broadcast %345 : f32 to vector<16x16xf32>
    %347 = arith.mulf %236, %346 : vector<16x16xf32>
    %348 = arith.addf %344, %347 : vector<16x16xf32>
    %c0_172 = arith.constant 0 : index
    %c4_173 = arith.constant 4 : index
    %c0_174 = arith.constant 0 : index
    %c0_175 = arith.constant 0 : index
    %349 = vector.load %arg6[%c0_172, %c4_173, %c0_174, %c0_175] : memref<1x8x16x16xf32, #tpu.memory_space<vmem>>, vector<1x1x16x16xf32>
    %350 = vector.shape_cast %349 : vector<1x1x16x16xf32> to vector<16x16xf32>
    %351 = vector.shape_cast %348 : vector<16x16xf32> to vector<1x1x16x16xf32>
    tpu.vector_store %arg6[%c0_172, %c4_173, %c0_174, %c0_175], %351 {strides = array<i32>} : memref<1x8x16x16xf32, #tpu.memory_space<vmem>>, vector<1x1x16x16xf32>,
    %cst_176 = arith.constant 0.000000e+00 : f32
    %352 = vector.broadcast %cst_176 : f32 to vector<16x16xf32>
    %c5_177 = arith.constant 5 : index
    %353 = memref.load %arg4[%c5_177] : memref<8xf32, #tpu.memory_space<smem>>
    %354 = vector.broadcast %353 : f32 to vector<16x16xf32>
    %355 = arith.addf %352, %354 : vector<16x16xf32>
    %c20_178 = arith.constant 20 : index
    %356 = memref.load %arg3[%c20_178] : memref<32xf32, #tpu.memory_space<smem>>
    %357 = vector.broadcast %356 : f32 to vector<16x16xf32>
    %358 = arith.mulf %62, %357 : vector<16x16xf32>
    %359 = arith.addf %355, %358 : vector<16x16xf32>
    %c21_179 = arith.constant 21 : index
    %360 = memref.load %arg3[%c21_179] : memref<32xf32, #tpu.memory_space<smem>>
    %361 = vector.broadcast %360 : f32 to vector<16x16xf32>
    %362 = arith.mulf %120, %361 : vector<16x16xf32>
    %363 = arith.addf %359, %362 : vector<16x16xf32>
    %c22_180 = arith.constant 22 : index
    %364 = memref.load %arg3[%c22_180] : memref<32xf32, #tpu.memory_space<smem>>
    %365 = vector.broadcast %364 : f32 to vector<16x16xf32>
    %366 = arith.mulf %178, %365 : vector<16x16xf32>
    %367 = arith.addf %363, %366 : vector<16x16xf32>
    %c23_181 = arith.constant 23 : index
    %368 = memref.load %arg3[%c23_181] : memref<32xf32, #tpu.memory_space<smem>>
    %369 = vector.broadcast %368 : f32 to vector<16x16xf32>
    %370 = arith.mulf %236, %369 : vector<16x16xf32>
    %371 = arith.addf %367, %370 : vector<16x16xf32>
    %c0_182 = arith.constant 0 : index
    %c5_183 = arith.constant 5 : index
    %c0_184 = arith.constant 0 : index
    %c0_185 = arith.constant 0 : index
    %372 = vector.load %arg6[%c0_182, %c5_183, %c0_184, %c0_185] : memref<1x8x16x16xf32, #tpu.memory_space<vmem>>, vector<1x1x16x16xf32>
    %373 = vector.shape_cast %372 : vector<1x1x16x16xf32> to vector<16x16xf32>
    %374 = vector.shape_cast %371 : vector<16x16xf32> to vector<1x1x16x16xf32>
    tpu.vector_store %arg6[%c0_182, %c5_183, %c0_184, %c0_185], %374 {strides = array<i32>} : memref<1x8x16x16xf32, #tpu.memory_space<vmem>>, vector<1x1x16x16xf32>,
    %cst_186 = arith.constant 0.000000e+00 : f32
    %375 = vector.broadcast %cst_186 : f32 to vector<16x16xf32>
    %c6_187 = arith.constant 6 : index
    %376 = memref.load %arg4[%c6_187] : memref<8xf32, #tpu.memory_space<smem>>
    %377 = vector.broadcast %376 : f32 to vector<16x16xf32>
    %378 = arith.addf %375, %377 : vector<16x16xf32>
    %c24_188 = arith.constant 24 : index
    %379 = memref.load %arg3[%c24_188] : memref<32xf32, #tpu.memory_space<smem>>
    %380 = vector.broadcast %379 : f32 to vector<16x16xf32>
    %381 = arith.mulf %62, %380 : vector<16x16xf32>
    %382 = arith.addf %378, %381 : vector<16x16xf32>
    %c25_189 = arith.constant 25 : index
    %383 = memref.load %arg3[%c25_189] : memref<32xf32, #tpu.memory_space<smem>>
    %384 = vector.broadcast %383 : f32 to vector<16x16xf32>
    %385 = arith.mulf %120, %384 : vector<16x16xf32>
    %386 = arith.addf %382, %385 : vector<16x16xf32>
    %c26_190 = arith.constant 26 : index
    %387 = memref.load %arg3[%c26_190] : memref<32xf32, #tpu.memory_space<smem>>
    %388 = vector.broadcast %387 : f32 to vector<16x16xf32>
    %389 = arith.mulf %178, %388 : vector<16x16xf32>
    %390 = arith.addf %386, %389 : vector<16x16xf32>
    %c27_191 = arith.constant 27 : index
    %391 = memref.load %arg3[%c27_191] : memref<32xf32, #tpu.memory_space<smem>>
    %392 = vector.broadcast %391 : f32 to vector<16x16xf32>
    %393 = arith.mulf %236, %392 : vector<16x16xf32>
    %394 = arith.addf %390, %393 : vector<16x16xf32>
    %c0_192 = arith.constant 0 : index
    %c6_193 = arith.constant 6 : index
    %c0_194 = arith.constant 0 : index
    %c0_195 = arith.constant 0 : index
    %395 = vector.load %arg6[%c0_192, %c6_193, %c0_194, %c0_195] : memref<1x8x16x16xf32, #tpu.memory_space<vmem>>, vector<1x1x16x16xf32>
    %396 = vector.shape_cast %395 : vector<1x1x16x16xf32> to vector<16x16xf32>
    %397 = vector.shape_cast %394 : vector<16x16xf32> to vector<1x1x16x16xf32>
    tpu.vector_store %arg6[%c0_192, %c6_193, %c0_194, %c0_195], %397 {strides = array<i32>} : memref<1x8x16x16xf32, #tpu.memory_space<vmem>>, vector<1x1x16x16xf32>,
    %cst_196 = arith.constant 0.000000e+00 : f32
    %398 = vector.broadcast %cst_196 : f32 to vector<16x16xf32>
    %c7_197 = arith.constant 7 : index
    %399 = memref.load %arg4[%c7_197] : memref<8xf32, #tpu.memory_space<smem>>
    %400 = vector.broadcast %399 : f32 to vector<16x16xf32>
    %401 = arith.addf %398, %400 : vector<16x16xf32>
    %c28_198 = arith.constant 28 : index
    %402 = memref.load %arg3[%c28_198] : memref<32xf32, #tpu.memory_space<smem>>
    %403 = vector.broadcast %402 : f32 to vector<16x16xf32>
    %404 = arith.mulf %62, %403 : vector<16x16xf32>
    %405 = arith.addf %401, %404 : vector<16x16xf32>
    %c29_199 = arith.constant 29 : index
    %406 = memref.load %arg3[%c29_199] : memref<32xf32, #tpu.memory_space<smem>>
    %407 = vector.broadcast %406 : f32 to vector<16x16xf32>
    %408 = arith.mulf %120, %407 : vector<16x16xf32>
    %409 = arith.addf %405, %408 : vector<16x16xf32>
    %c30_200 = arith.constant 30 : index
    %410 = memref.load %arg3[%c30_200] : memref<32xf32, #tpu.memory_space<smem>>
    %411 = vector.broadcast %410 : f32 to vector<16x16xf32>
    %412 = arith.mulf %178, %411 : vector<16x16xf32>
    %413 = arith.addf %409, %412 : vector<16x16xf32>
    %c31_201 = arith.constant 31 : index
    %414 = memref.load %arg3[%c31_201] : memref<32xf32, #tpu.memory_space<smem>>
    %415 = vector.broadcast %414 : f32 to vector<16x16xf32>
    %416 = arith.mulf %236, %415 : vector<16x16xf32>
    %417 = arith.addf %413, %416 : vector<16x16xf32>
    %c0_202 = arith.constant 0 : index
    %c7_203 = arith.constant 7 : index
    %c0_204 = arith.constant 0 : index
    %c0_205 = arith.constant 0 : index
    %418 = vector.load %arg6[%c0_202, %c7_203, %c0_204, %c0_205] : memref<1x8x16x16xf32, #tpu.memory_space<vmem>>, vector<1x1x16x16xf32>
    %419 = vector.shape_cast %418 : vector<1x1x16x16xf32> to vector<16x16xf32>
    %420 = vector.shape_cast %417 : vector<16x16xf32> to vector<1x1x16x16xf32>
    tpu.vector_store %arg6[%c0_202, %c7_203, %c0_204, %c0_205], %420 {strides = array<i32>} : memref<1x8x16x16xf32, #tpu.memory_space<vmem>>, vector<1x1x16x16xf32>,
    return
  }
  func.func @transform_0(%arg0: i32) -> i32 {
    %c0_i32 = arith.constant 0 : i32
    %c0_i32_0 = arith.constant 0 : i32
    return %c0_i32 : i32
  }
  func.func @transform_1(%arg0: i32) -> i32 {
    %c0_i32 = arith.constant 0 : i32
    %c0_i32_0 = arith.constant 0 : i32
    return %c0_i32 : i32
  }
  func.func @transform_2(%arg0: i32) -> i32 {
    %c0_i32 = arith.constant 0 : i32
    %c0_i32_0 = arith.constant 0 : i32
    return %c0_i32 : i32
  }
  func.func @transform_3(%arg0: i32) -> i32 {
    %c0_i32 = arith.constant 0 : i32
    %c0_i32_0 = arith.constant 0 : i32
    return %c0_i32 : i32
  }
  func.func @transform_4(%arg0: i32) -> (i32, i32, i32, i32) {
    %c0_i32 = arith.constant 0 : i32
    %c0_i32_0 = arith.constant 0 : i32
    %c0_i32_1 = arith.constant 0 : i32
    %c0_i32_2 = arith.constant 0 : i32
    return %arg0, %c0_i32, %c0_i32_0, %c0_i32_1 : i32, i32, i32, i32
  }
  func.func @transform_5(%arg0: i32) -> (i32, i32, i32, i32) {
    %c0_i32 = arith.constant 0 : i32
    %c0_i32_0 = arith.constant 0 : i32
    %c0_i32_1 = arith.constant 0 : i32
    %c0_i32_2 = arith.constant 0 : i32
    return %arg0, %c0_i32, %c0_i32_0, %c0_i32_1 : i32, i32, i32, i32
  }
}

</mosaic_0001>

<llo_original>
// kernel: tpu_custom_call.1
$region0: #{tpu_custom_call.1}
  #allocation0 [shape = 'u32[]', space=smem, size = 0x4, offset = 0x4, fixed_abs, tag = 'smem constant byte address 0x4 - core index']
  #allocation1 [shape = 'u32[144,128]{1,0:T(1,128)}', space=vmem, size = 0x12000, scoped, tag = 'internal scratch']
  #allocation2 [shape = 'f32[4,18,18]{2,1,0:T(8,128)}', space=vmem, size = 0xc000, scoped, tag = 'scratch operand']
  %s0 = inlined_call_operand.hbm [shape: f32[36], index: 0, kind: input, shape index: {}]
  %s1 = inlined_call_operand.vmem [shape: f32[4], index: 1, kind: input, shape index: {}]
  %s2 = inlined_call_operand.vmem [shape: f32[32], index: 2, kind: input, shape index: {}]
  %s3 = inlined_call_operand.vmem [shape: f32[8], index: 3, kind: input, shape index: {}]
  %s4 = inlined_call_operand.hbm [shape: f32[2,4,16,16], index: 4, kind: input, shape index: {}]
  %s5 = inlined_call_operand.hbm [shape: f32[2,8,16,16], index: 5, kind: output, shape index: {}]
  %s6 = sld [smem:[#allocation0]]
  $region73: #{tpu_custom_call.1} parent=0
    _
  %s8 = ssub.s32 1, %s6
  %s9 = scalar_select 0, %s8, %s6
  $region1: #{tpu_custom_call.1} parent=0
    #allocation3 [shape = 'u8[512]{0}', space=smem, size = 0x200, scoped, tag = 'input window, operand 0, single buffered']
    #allocation4 [shape = 's32[2]{0}', space=sflag, size = 0x8, scoped, tag = 'scoped memory for tpu_custom_call.1']
    #allocation5 [shape = 's32[2]{0}', space=sflag, size = 0x8, scoped, tag = 'scoped memory for tpu_custom_call.1']
    #allocation6 [shape = 's32[2]{0}', space=sflag, size = 0x8, scoped, tag = 'scoped memory for tpu_custom_call.1']
    #allocation7 [shape = 's32[2]{0}', space=sflag, size = 0x8, scoped, tag = 'scoped memory for tpu_custom_call.1']
    #allocation8 [shape = 'u8[512]{0}', space=smem, size = 0x200, scoped, tag = 'input window, operand 1, single buffered']
    #allocation9 [shape = 'u8[512]{0}', space=smem, size = 0x200, scoped, tag = 'input window, operand 2, single buffered']
    #allocation10 [shape = 's32[1]{0}', space=sflag, size = 0x4, scoped, tag = 'scoped memory for tpu_custom_call.1']
    #allocation11 [shape = 'u8[512]{0}', space=smem, size = 0x200, scoped, tag = 'input window, operand 3, single buffered']
    #allocation12 [shape = 'u8[65536]{0}', space=vmem, size = 0x10000, scoped, tag = 'input window, operand 4']
    #allocation13 [shape = 'u8[131072]{0}', space=vmem, size = 0x20000, scoped, tag = 'output window, operand 0']
    %10 = vsyncpa [#allocation6], 0
    %11 = vsyncpa [#allocation7], 0
    %12 = vsyncpa [#allocation10], 0
    %13 = vsyncpa [#allocation4], 0
    %s14 = scalar_lea.sflag [#allocation4], 1
    %15 = vsyncpa %s14, 0
    %16 = vsyncpa [#allocation5], 0
    %s17 = scalar_lea.sflag [#allocation5], 1
    %18 = vsyncpa %s17, 0
    loop: start=0, step=1, limit=4
    $region2: #{tpu_custom_call.1} parent=1 // loop_pre_header
      _
    $region3: #{tpu_custom_call.1} parent=1 // loop_header
      %s20 = sphi 0, %s24
      %p21 = scmp.ge.s32.totalorder %s20, 4
      %s28 = sphi 0, %s28
      %s30 = sphi 0, %s28
      %s31 = sphi 0, %s30
      %s45 = sphi 0, %s31
      %s49 = sphi 0, %s49
      %s51 = sphi 0, %s49
      %s52 = sphi 0, %s51
      %s66 = sphi 0, %s52
      %s70 = sphi 0, %s70
      %s72 = sphi 0, %s70
      %s73 = sphi 0, %s72
      %s87 = sphi 0, %s73
      %s91 = sphi 0, %s91
      %s93 = sphi 0, %s91
      %s94 = sphi 0, %s93
      %s108 = sphi 0, %s94
      %s114 = sphi 0, %s116
      %s117 = sphi 0, %s114
      %s118 = sphi 0, %s117
      %s134 = sphi 0, %s118
      %s140 = sphi 0, %s142
      %s143 = sphi 0, %s140
      %s144 = sphi 0, %s143
      %s160 = sphi 0, %s144
    $region4: #{tpu_custom_call.1} parent=1 // loop_header_branch
      %23 = sbr.rel (%p21) target = $region8
    $region5: #{tpu_custom_call.1} parent=1 // loop_body
      %s25 = ssub.s32 %s20, 1
      %s26 = ssub.s32 %s20, 2
      %s27 = sadd.s32 %s20, 1
      %s29 = sadd.s32 %s28, 1
      %p32 = scmp.eq.s32.totalorder %s20, 1
      %p33 = scmp.ne.s32.totalorder %s28, %s30
      %p34 = scmp.eq.s32.totalorder %s20, 0
      %p35 = por %p33, %p34
      %p36 = scmp.ne.s32.totalorder %s28, %s30
      %p37 = scmp.eq.s32.totalorder %s25, 1
      %p38 = por %p36, %p37
      %p39 = scmp.ne.s32.totalorder %s30, %s31
      %p40 = scmp.eq.s32.totalorder %s25, 0
      %p41 = por %p39, %p40
      %p42 = scmp.ne.s32.totalorder %s30, %s31
      %p43 = scmp.eq.s32.totalorder %s26, 1
      %p44 = por %p42, %p43
      %p46 = scmp.ne.s32.totalorder %s31, %s45
      %p47 = scmp.eq.s32.totalorder %s26, 0
      %p48 = por %p46, %p47
      %s50 = sadd.s32 %s49, 1
      %p53 = scmp.eq.s32.totalorder %s20, 1
      %p54 = scmp.ne.s32.totalorder %s49, %s51
      %p55 = scmp.eq.s32.totalorder %s20, 0
      %p56 = por %p54, %p55
      %p57 = scmp.ne.s32.totalorder %s49, %s51
      %p58 = scmp.eq.s32.totalorder %s25, 1
      %p59 = por %p57, %p58
      %p60 = scmp.ne.s32.totalorder %s51, %s52
      %p61 = scmp.eq.s32.totalorder %s25, 0
      %p62 = por %p60, %p61
      %p63 = scmp.ne.s32.totalorder %s51, %s52
      %p64 = scmp.eq.s32.totalorder %s26, 1
      %p65 = por %p63, %p64
      %p67 = scmp.ne.s32.totalorder %s52, %s66
      %p68 = scmp.eq.s32.totalorder %s26, 0
      %p69 = por %p67, %p68
      %s71 = sadd.s32 %s70, 1
      %p74 = scmp.eq.s32.totalorder %s20, 1
      %p75 = scmp.ne.s32.totalorder %s70, %s72
      %p76 = scmp.eq.s32.totalorder %s20, 0
      %p77 = por %p75, %p76
      %p78 = scmp.ne.s32.totalorder %s70, %s72
      %p79 = scmp.eq.s32.totalorder %s25, 1
      %p80 = por %p78, %p79
      %p81 = scmp.ne.s32.totalorder %s72, %s73
      %p82 = scmp.eq.s32.totalorder %s25, 0
      %p83 = por %p81, %p82
      %p84 = scmp.ne.s32.totalorder %s72, %s73
      %p85 = scmp.eq.s32.totalorder %s26, 1
      %p86 = por %p84, %p85
      %p88 = scmp.ne.s32.totalorder %s73, %s87
      %p89 = scmp.eq.s32.totalorder %s26, 0
      %p90 = por %p88, %p89
      %s92 = sadd.s32 %s91, 1
      %p95 = scmp.eq.s32.totalorder %s20, 1
      %p96 = scmp.ne.s32.totalorder %s91, %s93
      %p97 = scmp.eq.s32.totalorder %s20, 0
      %p98 = por %p96, %p97
      %p99 = scmp.ne.s32.totalorder %s91, %s93
      %p100 = scmp.eq.s32.totalorder %s25, 1
      %p101 = por %p99, %p100
      %p102 = scmp.ne.s32.totalorder %s93, %s94
      %p103 = scmp.eq.s32.totalorder %s25, 0
      %p104 = por %p102, %p103
      %p105 = scmp.ne.s32.totalorder %s93, %s94
      %p106 = scmp.eq.s32.totalorder %s26, 1
      %p107 = por %p105, %p106
      %p109 = scmp.ne.s32.totalorder %s94, %s108
      %p110 = scmp.eq.s32.totalorder %s26, 0
      %p111 = por %p109, %p110
      %s112 = ssub.s32 %s20, %s27
      %p113 = scmp.eq.s32.totalorder %s112, 0
      %s115 = sadd.s32 %s114, 1
      %s116 = scalar_select %p113, %s114, %s115
      %p119 = pneg %p113
      %p120 = scmp.eq.s32.totalorder %s20, 1
      %p121 = por %p119, %p120
      %p122 = scmp.ne.s32.totalorder %s114, %s117
      %p123 = scmp.eq.s32.totalorder %s20, 0
      %p124 = por %p122, %p123
      %p125 = scmp.ne.s32.totalorder %s114, %s117
      %p126 = scmp.eq.s32.totalorder %s25, 1
      %p127 = por %p125, %p126
      %p128 = scmp.ne.s32.totalorder %s117, %s118
      %p129 = scmp.eq.s32.totalorder %s25, 0
      %p130 = por %p128, %p129
      %p131 = scmp.ne.s32.totalorder %s117, %s118
      %p132 = scmp.eq.s32.totalorder %s26, 1
      %p133 = por %p131, %p132
      %p135 = scmp.ne.s32.totalorder %s118, %s134
      %p136 = scmp.eq.s32.totalorder %s26, 0
      %p137 = por %p135, %p136
      %s138 = ssub.s32 %s20, %s27
      %p139 = scmp.eq.s32.totalorder %s138, 0
      %s141 = sadd.s32 %s140, 1
      %s142 = scalar_select %p139, %s140, %s141
      %p145 = pneg %p139
      %p146 = scmp.eq.s32.totalorder %s20, 1
      %p147 = por %p145, %p146
      %p148 = scmp.ne.s32.totalorder %s140, %s143
      %p149 = scmp.eq.s32.totalorder %s20, 0
      %p150 = por %p148, %p149
      %p151 = scmp.ne.s32.totalorder %s140, %s143
      %p152 = scmp.eq.s32.totalorder %s25, 1
      %p153 = por %p151, %p152
      %p154 = scmp.ne.s32.totalorder %s143, %s144
      %p155 = scmp.eq.s32.totalorder %s25, 0
      %p156 = por %p154, %p155
      %p157 = scmp.ne.s32.totalorder %s143, %s144
      %p158 = scmp.eq.s32.totalorder %s26, 1
      %p159 = por %p157, %p158
      %p161 = scmp.ne.s32.totalorder %s144, %s160
      %p162 = scmp.eq.s32.totalorder %s26, 0
      %p163 = por %p161, %p162
      %p164 = scmp.le.s32.totalorder 1, %s20
      %p165 = scmp.lt.s32.totalorder %s20, 3
      %p166 = pnand %p164, %p165
      %p167 = pneg %p166
      // Predicated region
      $region9: #{tpu_custom_call.1} parent=5 // pred_check
        _
      $region10: #{tpu_custom_call.1} parent=5 // pred_check_branch
        %169 = sbr.rel (%p166) target = $region12
      $region11: #{tpu_custom_call.1} parent=5 // pred_region
        %s170 = ssub.s32 %s20, 1
        // Predicated region
        $region13: #{tpu_custom_call.1} parent=11 // pred_check
          %p171 = pneg %p41
        $region14: #{tpu_custom_call.1} parent=11 // pred_check_branch
          %173 = sbr.rel (%p171) target = $region16
        $region15: #{tpu_custom_call.1} parent=11 // pred_region
          %s175 = ssub.s32 16, 16
          %176 = vsyncadd [#allocation6], %s175
          %179 = dma.hbm_to_smem %s0, 16, [#allocation3], [#allocation6]
        $region16: #{tpu_custom_call.1} parent=11 // pred_fallthru
          _
        // Predicated region
        $region17: #{tpu_custom_call.1} parent=11 // pred_check
          %p180 = pneg %p62
        $region18: #{tpu_custom_call.1} parent=11 // pred_check_branch
          %182 = sbr.rel (%p180) target = $region20
        $region19: #{tpu_custom_call.1} parent=11 // pred_region
          %s184 = ssub.s32 16, 16
          %185 = vsyncadd [#allocation7], %s184
          %s187 = sshll.u32 %s1, 4
          %s188 = int_to_ptr.vmem [resolvable:$true] %s187
          %190 = dma.vmem_to_smem %s188, 16, [#allocation8], [#allocation7]
        $region20: #{tpu_custom_call.1} parent=11 // pred_fallthru
          _
        // Predicated region
        $region21: #{tpu_custom_call.1} parent=11 // pred_check
          %p191 = pneg %p83
        $region22: #{tpu_custom_call.1} parent=11 // pred_check_branch
          %193 = sbr.rel (%p191) target = $region24
        $region23: #{tpu_custom_call.1} parent=11 // pred_region
          %s195 = ssub.s32 16, 16
          %196 = vsyncadd [#allocation10], %s195
          %s198 = sshll.u32 %s2, 4
          %s199 = int_to_ptr.vmem [resolvable:$true] %s198
          %201 = dma.vmem_to_smem %s199, 16, [#allocation9], [#allocation10]
        $region24: #{tpu_custom_call.1} parent=11 // pred_fallthru
          _
        // Predicated region
        $region25: #{tpu_custom_call.1} parent=11 // pred_check
          %p202 = pneg %p104
        $region26: #{tpu_custom_call.1} parent=11 // pred_check_branch
          %204 = sbr.rel (%p202) target = $region28
        $region27: #{tpu_custom_call.1} parent=11 // pred_region
          %s206 = ssub.s32 16, 16
          %207 = vsyncadd [#allocation10], %s206
          %s209 = sshll.u32 %s3, 4
          %s210 = int_to_ptr.vmem [resolvable:$true] %s209
          %212 = dma.vmem_to_smem %s210, 16, [#allocation11], [#allocation10]
        $region28: #{tpu_custom_call.1} parent=11 // pred_fallthru
          _
      $region12: #{tpu_custom_call.1} parent=5 // pred_fallthru
        _
      %p213 = scmp.lt.s32.totalorder %s20, 2
      // Predicated region
      $region29: #{tpu_custom_call.1} parent=5 // pred_check
        %p214 = pneg %p213
      $region30: #{tpu_custom_call.1} parent=5 // pred_check_branch
        %216 = sbr.rel (%p214) target = $region32
      $region31: #{tpu_custom_call.1} parent=5 // pred_region
        // Predicated region
        $region33: #{tpu_custom_call.1} parent=31 // pred_check
          %p217 = pneg %p124
        $region34: #{tpu_custom_call.1} parent=31 // pred_check_branch
          %219 = sbr.rel (%p217) target = $region36
        $region35: #{tpu_custom_call.1} parent=31 // pred_region
          %s220 = sand.u32 %s114, 1
          %s221 = scalar_lea.sflag [#allocation4], %s220
          %s222 = sand.u32 %s114, 1
          %s223 = smul.addr %s222, 64
          %s224 = scalar_lea.vmem [#allocation12], %s223
          %s226 = ssub.s32 1024, 1024
          %227 = vsyncadd %s221, %s226
          %s228 = smul.addr %s20, 8
          %s229 = smul.addr %s228, 128
          %s230 = scalar_lea.hbm %s4, %s229
          %s231 = sshll.u32 %s224, 4
          %s232 = int_to_ptr.vmem [resolvable:$true] %s231
          %237 = dma.hbm_to_vmem [thread:$0]  %s230, 1024, %s232, %s221, 128, 128, 8
        $region36: #{tpu_custom_call.1} parent=31 // pred_fallthru
          _
      $region32: #{tpu_custom_call.1} parent=5 // pred_fallthru
        _
      %p238 = scmp.le.s32.totalorder 1, %s20
      %p239 = scmp.lt.s32.totalorder %s20, 3
      %p240 = pnand %p238, %p239
      %p241 = pneg %p240
      // Predicated region
      $region37: #{tpu_custom_call.1} parent=5 // pred_check
        _
      $region38: #{tpu_custom_call.1} parent=5 // pred_check_branch
        %243 = sbr.rel (%p240) target = $region40
      $region39: #{tpu_custom_call.1} parent=5 // pred_region
        %s244 = ssub.s32 %s20, 1
        // Predicated region
        $region41: #{tpu_custom_call.1} parent=39 // pred_check
          %p245 = pneg %p41
        $region42: #{tpu_custom_call.1} parent=39 // pred_check_branch
          %247 = sbr.rel (%p245) target = $region44
        $region43: #{tpu_custom_call.1} parent=39 // pred_region
          %248 = dma.done [#allocation6], 16
        $region44: #{tpu_custom_call.1} parent=39 // pred_fallthru
          _
        // Predicated region
        $region45: #{tpu_custom_call.1} parent=39 // pred_check
          %p249 = pneg %p62
        $region46: #{tpu_custom_call.1} parent=39 // pred_check_branch
          %251 = sbr.rel (%p249) target = $region48
        $region47: #{tpu_custom_call.1} parent=39 // pred_region
          %252 = dma.done [#allocation7], 16
        $region48: #{tpu_custom_call.1} parent=39 // pred_fallthru
          _
        // Predicated region
        $region49: #{tpu_custom_call.1} parent=39 // pred_check
          %p253 = pneg %p83
        $region50: #{tpu_custom_call.1} parent=39 // pred_check_branch
          %255 = sbr.rel (%p253) target = $region52
        $region51: #{tpu_custom_call.1} parent=39 // pred_region
          %256 = dma.done [#allocation10], 16
        $region52: #{tpu_custom_call.1} parent=39 // pred_fallthru
          _
        // Predicated region
        $region53: #{tpu_custom_call.1} parent=39 // pred_check
          %p257 = pneg %p104
        $region54: #{tpu_custom_call.1} parent=39 // pred_check_branch
          %259 = sbr.rel (%p257) target = $region56
        $region55: #{tpu_custom_call.1} parent=39 // pred_region
          %260 = dma.done [#allocation10], 16
        $region56: #{tpu_custom_call.1} parent=39 // pred_fallthru
          _
        %s261 = sand.u32 %s117, 1
        %s262 = scalar_lea.sflag [#allocation4], %s261
        %s263 = sand.u32 %s117, 1
        %s264 = smul.addr %s263, 64
        %s265 = scalar_lea.vmem [#allocation12], %s264
        // Predicated region
        $region57: #{tpu_custom_call.1} parent=39 // pred_check
          %p266 = pneg %p130
        $region58: #{tpu_custom_call.1} parent=39 // pred_check_branch
          %268 = sbr.rel (%p266) target = $region60
        $region59: #{tpu_custom_call.1} parent=39 // pred_region
          %269 = dma.done %s262, 1024
        $region60: #{tpu_custom_call.1} parent=39 // pred_fallthru
          _
        %270 = sfence
        %p271 = pneg %p41
        %p272 = pneg %p38
        %p273 = pneg %p62
        %p274 = pneg %p59
        %p275 = pneg %p83
        %p276 = pneg %p80
        %p277 = pneg %p104
        %p278 = pneg %p101
        %s279 = sand.u32 %s117, 1
        %s280 = scalar_lea.sflag [#allocation4], %s279
        %s281 = sand.u32 %s117, 1
        %s282 = smul.addr %s281, 64
        %s283 = scalar_lea.vmem [#allocation12], %s282
        %p284 = pneg %p130
        %p285 = pneg %p127
        %p286 = pneg %p156
        %p287 = pneg %p153
        %s288 = sand.u32 %s143, 1
        %s289 = scalar_lea.sflag [#allocation5], %s288
        %s290 = sand.u32 %s143, 1
        %s291 = smul.addr %s290, 128
        %s292 = scalar_lea.vmem [#allocation13], %s291
        %vm293 = vcmask 146432
        %294 = vst.msk [vmem:[#allocation2] sm:$0xff] %vm293, 0.0
        %295 = vst.msk [vmem:[#allocation2 + $0x8] sm:$0xff] %vm293, 0.0
        %vm296 = vcmask 140288
        %297 = vst.msk [vmem:[#allocation2 + $0x10] sm:$0x3] %vm296, 0.0
        %298 = vst.msk [vmem:[#allocation2 + $0x18] sm:$0xff] %vm293, 0.0
        %299 = vst.msk [vmem:[#allocation2 + $0x20] sm:$0xff] %vm293, 0.0
        %300 = vst.msk [vmem:[#allocation2 + $0x28] sm:$0x3] %vm296, 0.0
        %301 = vst.msk [vmem:[#allocation2 + $0x30] sm:$0xff] %vm293, 0.0
        %302 = vst.msk [vmem:[#allocation2 + $0x38] sm:$0xff] %vm293, 0.0
        %303 = vst.msk [vmem:[#allocation2 + $0x40] sm:$0x3] %vm296, 0.0
        %304 = vst.msk [vmem:[#allocation2 + $0x48] sm:$0xff] %vm293, 0.0
        %305 = vst.msk [vmem:[#allocation2 + $0x50] sm:$0xff] %vm293, 0.0
        %306 = vst.msk [vmem:[#allocation2 + $0x58] sm:$0x3] %vm296, 0.0
        %v307 = vld [vmem:[%s265] sm:$0xff]
        %v308 = vld [vmem:[%s265 + $0x8] sm:$0xff]
        %v309 = vld [vmem:[%s265 + $0x10] sm:$0xff]
        %v310 = vld [vmem:[%s265 + $0x18] sm:$0xff]
        %v311 = vld [vmem:[%s265 + $0x20] sm:$0xff]
        %v312 = vld [vmem:[%s265 + $0x28] sm:$0xff]
        %v313 = vld [vmem:[%s265 + $0x30] sm:$0xff]
        %v314 = vld [vmem:[%s265 + $0x38] sm:$0xff]
        %323 = vrot.lane.b32.xlu0 %v307, 1
        %v324 = vpop.permute.xlu0 %323
        %325 = vrot.lane.b32.xlu0 %v308, 1
        %v326 = vpop.permute.xlu0 %325
        %327 = vrot.lane.b32.xlu0 %v309, 1
        %v328 = vpop.permute.xlu0 %327
        %329 = vrot.lane.b32.xlu0 %v310, 1
        %v330 = vpop.permute.xlu0 %329
        %331 = vrot.lane.b32.xlu0 %v311, 1
        %v332 = vpop.permute.xlu0 %331
        %333 = vrot.lane.b32.xlu0 %v312, 1
        %v334 = vpop.permute.xlu0 %333
        %335 = vrot.lane.b32.xlu0 %v313, 1
        %v336 = vpop.permute.xlu0 %335
        %337 = vrot.lane.b32.xlu0 %v314, 1
        %v338 = vpop.permute.xlu0 %337
        %vm347 = vcmask 138248
        %348 = vst.msk [vmem:[#allocation2 + $0x1] sm:$0xff] %vm347, %v324
        %349 = vst.msk [vmem:[#allocation2 + $0x9] sm:$0xff] %vm347, %v326
        %350 = vst.msk [vmem:[#allocation2 + $0x19] sm:$0xff] %vm347, %v328
        %351 = vst.msk [vmem:[#allocation2 + $0x21] sm:$0xff] %vm347, %v330
        %352 = vst.msk [vmem:[#allocation2 + $0x31] sm:$0xff] %vm347, %v332
        %353 = vst.msk [vmem:[#allocation2 + $0x39] sm:$0xff] %vm347, %v334
        %354 = vst.msk [vmem:[#allocation2 + $0x49] sm:$0xff] %vm347, %v336
        %355 = vst.msk [vmem:[#allocation2 + $0x51] sm:$0xff] %vm347, %v338
        %s356 = sld [smem:[#allocation8]]
        %v357 = vstv %s356
        %v358 = vadd.f32 %v357, 0.0
        %s359 = sld [smem:[#allocation3]]
        %v360 = vld [vmem:[#allocation2] sm:$0xff]
        %v361 = vld [vmem:[#allocation2 + $0x8] sm:$0xff]
        %v362 = vstv %s359
        %v363 = vmul.f32 %v360, %v362
        %v364 = vmul.f32 %v361, %v362
        %v365 = vadd.f32 %v358, %v363
        %v366 = vadd.f32 %v358, %v364
        %s367 = sld [smem:[#allocation3 + $0x1]]
        %v368 = vstv %s367
        %v369 = vmul.f32 %v360, %v368
        %v370 = vmul.f32 %v361, %v368
        %373 = vrot.lane.b32.xlu0 %v369, 127
        %v374 = vpop.permute.xlu0 %373
        %375 = vrot.lane.b32.xlu0 %v370, 127
        %v376 = vpop.permute.xlu0 %375
        %v379 = vadd.f32 %v365, %v374
        %v380 = vadd.f32 %v366, %v376
        %s381 = sld [smem:[#allocation3 + $0x2]]
        %v382 = vstv %s381
        %v383 = vmul.f32 %v360, %v382
        %v384 = vmul.f32 %v361, %v382
        %387 = vrot.lane.b32.xlu0 %v383, 126
        %v388 = vpop.permute.xlu0 %387
        %389 = vrot.lane.b32.xlu0 %v384, 126
        %v390 = vpop.permute.xlu0 %389
        %v393 = vadd.f32 %v379, %v388
        %v394 = vadd.f32 %v380, %v390
        %s395 = sld [smem:[#allocation3 + $0x3]]
        %v396 = vld [vmem:[#allocation2 + $0x1] sm:$0xff]
        %v397 = vld [vmem:[#allocation2 + $0x9] sm:$0xff]
        %v398 = vstv %s395
        %v399 = vmul.f32 %v396, %v398
        %v400 = vmul.f32 %v397, %v398
        %v401 = vadd.f32 %v393, %v399
        %v402 = vadd.f32 %v394, %v400
        %s403 = sld [smem:[#allocation3 + $0x4]]
        %v404 = vstv %s403
        %v405 = vmul.f32 %v396, %v404
        %v406 = vmul.f32 %v397, %v404
        %409 = vrot.lane.b32.xlu0 %v405, 127
        %v410 = vpop.permute.xlu0 %409
        %411 = vrot.lane.b32.xlu0 %v406, 127
        %v412 = vpop.permute.xlu0 %411
        %v415 = vadd.f32 %v401, %v410
        %v416 = vadd.f32 %v402, %v412
        %s417 = sld [smem:[#allocation3 + $0x5]]
        %v418 = vstv %s417
        %v419 = vmul.f32 %v396, %v418
        %v420 = vmul.f32 %v397, %v418
        %423 = vrot.lane.b32.xlu0 %v419, 126
        %v424 = vpop.permute.xlu0 %423
        %425 = vrot.lane.b32.xlu0 %v420, 126
        %v426 = vpop.permute.xlu0 %425
        %v429 = vadd.f32 %v415, %v424
        %v430 = vadd.f32 %v416, %v426
        %s431 = sld [smem:[#allocation3 + $0x6]]
        %v432 = vld [vmem:[#allocation2 + $0x2] sm:$0xff]
        %v433 = vld [vmem:[#allocation2 + $0xa] sm:$0xff]
        %v434 = vstv %s431
        %v435 = vmul.f32 %v432, %v434
        %v436 = vmul.f32 %v433, %v434
        %v437 = vadd.f32 %v429, %v435
        %v438 = vadd.f32 %v430, %v436
        %s439 = sld [smem:[#allocation3 + $0x7]]
        %v440 = vstv %s439
        %v441 = vmul.f32 %v432, %v440
        %v442 = vmul.f32 %v433, %v440
        %445 = vrot.lane.b32.xlu0 %v441, 127
        %v446 = vpop.permute.xlu0 %445
        %447 = vrot.lane.b32.xlu0 %v442, 127
        %v448 = vpop.permute.xlu0 %447
        %v451 = vadd.f32 %v437, %v446
        %v452 = vadd.f32 %v438, %v448
        %s453 = sld [smem:[#allocation3 + $0x8]]
        %v454 = vstv %s453
        %v455 = vmul.f32 %v432, %v454
        %v456 = vmul.f32 %v433, %v454
        %459 = vrot.lane.b32.xlu0 %v455, 126
        %v460 = vpop.permute.xlu0 %459
        %461 = vrot.lane.b32.xlu0 %v456, 126
        %v462 = vpop.permute.xlu0 %461
        %v465 = vadd.f32 %v451, %v460
        %v466 = vadd.f32 %v452, %v462
        %s467 = sld [smem:[#allocation8 + $0x1]]
        %v468 = vstv %s467
        %v469 = vadd.f32 %v468, 0.0
        %s470 = sld [smem:[#allocation3 + $0x9]]
        %s471 = scalar_lea.vmem [#allocation2], 24
        %v472 = vld [vmem:[%s471] sm:$0xff]
        %v473 = vld [vmem:[%s471 + $0x8] sm:$0xff]
        %v474 = vstv %s470
        %v475 = vmul.f32 %v472, %v474
        %v476 = vmul.f32 %v473, %v474
        %v477 = vadd.f32 %v469, %v475
        %v478 = vadd.f32 %v469, %v476
        %s479 = sld [smem:[#allocation3 + $0xa]]
        %v480 = vstv %s479
        %v481 = vmul.f32 %v472, %v480
        %v482 = vmul.f32 %v473, %v480
        %485 = vrot.lane.b32.xlu0 %v481, 127
        %v486 = vpop.permute.xlu0 %485
        %487 = vrot.lane.b32.xlu0 %v482, 127
        %v488 = vpop.permute.xlu0 %487
        %v491 = vadd.f32 %v477, %v486
        %v492 = vadd.f32 %v478, %v488
        %s493 = sld [smem:[#allocation3 + $0xb]]
        %v494 = vstv %s493
        %v495 = vmul.f32 %v472, %v494
        %v496 = vmul.f32 %v473, %v494
        %499 = vrot.lane.b32.xlu0 %v495, 126
        %v500 = vpop.permute.xlu0 %499
        %501 = vrot.lane.b32.xlu0 %v496, 126
        %v502 = vpop.permute.xlu0 %501
        %v505 = vadd.f32 %v491, %v500
        %v506 = vadd.f32 %v492, %v502
        %s507 = sld [smem:[#allocation3 + $0xc]]
        %v508 = vld [vmem:[%s471 + $0x1] sm:$0xff]
        %v509 = vld [vmem:[%s471 + $0x9] sm:$0xff]
        %v510 = vstv %s507
        %v511 = vmul.f32 %v508, %v510
        %v512 = vmul.f32 %v509, %v510
        %v513 = vadd.f32 %v505, %v511
        %v514 = vadd.f32 %v506, %v512
        %s515 = sld [smem:[#allocation3 + $0xd]]
        %v516 = vstv %s515
        %v517 = vmul.f32 %v508, %v516
        %v518 = vmul.f32 %v509, %v516
        %521 = vrot.lane.b32.xlu0 %v517, 127
        %v522 = vpop.permute.xlu0 %521
        %523 = vrot.lane.b32.xlu0 %v518, 127
        %v524 = vpop.permute.xlu0 %523
        %v527 = vadd.f32 %v513, %v522
        %v528 = vadd.f32 %v514, %v524
        %s529 = sld [smem:[#allocation3 + $0xe]]
        %v530 = vstv %s529
        %v531 = vmul.f32 %v508, %v530
        %v532 = vmul.f32 %v509, %v530
        %535 = vrot.lane.b32.xlu0 %v531, 126
        %v536 = vpop.permute.xlu0 %535
        %537 = vrot.lane.b32.xlu0 %v532, 126
        %v538 = vpop.permute.xlu0 %537
        %v541 = vadd.f32 %v527, %v536
        %v542 = vadd.f32 %v528, %v538
        %s543 = sld [smem:[#allocation3 + $0xf]]
        %v544 = vld [vmem:[%s471 + $0x2] sm:$0xff]
        %v545 = vld [vmem:[%s471 + $0xa] sm:$0xff]
        %v546 = vstv %s543
        %v547 = vmul.f32 %v544, %v546
        %v548 = vmul.f32 %v545, %v546
        %v549 = vadd.f32 %v541, %v547
        %v550 = vadd.f32 %v542, %v548
        %s551 = sld [smem:[#allocation3 + $0x10]]
        %v552 = vstv %s551
        %v553 = vmul.f32 %v544, %v552
        %v554 = vmul.f32 %v545, %v552
        %557 = vrot.lane.b32.xlu0 %v553, 127
        %v558 = vpop.permute.xlu0 %557
        %559 = vrot.lane.b32.xlu0 %v554, 127
        %v560 = vpop.permute.xlu0 %559
        %v563 = vadd.f32 %v549, %v558
        %v564 = vadd.f32 %v550, %v560
        %s565 = sld [smem:[#allocation3 + $0x11]]
        %v566 = vstv %s565
        %v567 = vmul.f32 %v544, %v566
        %v568 = vmul.f32 %v545, %v566
        %571 = vrot.lane.b32.xlu0 %v567, 126
        %v572 = vpop.permute.xlu0 %571
        %573 = vrot.lane.b32.xlu0 %v568, 126
        %v574 = vpop.permute.xlu0 %573
        %v577 = vadd.f32 %v563, %v572
        %v578 = vadd.f32 %v564, %v574
        %s579 = sld [smem:[#allocation8 + $0x2]]
        %v580 = vstv %s579
        %v581 = vadd.f32 %v580, 0.0
        %s582 = sld [smem:[#allocation3 + $0x12]]
        %s583 = scalar_lea.vmem [#allocation2], 48
        %v584 = vld [vmem:[%s583] sm:$0xff]
        %v585 = vld [vmem:[%s583 + $0x8] sm:$0xff]
        %v586 = vstv %s582
        %v587 = vmul.f32 %v584, %v586
        %v588 = vmul.f32 %v585, %v586
        %v589 = vadd.f32 %v581, %v587
        %v590 = vadd.f32 %v581, %v588
        %s591 = sld [smem:[#allocation3 + $0x13]]
        %v592 = vstv %s591
        %v593 = vmul.f32 %v584, %v592
        %v594 = vmul.f32 %v585, %v592
        %597 = vrot.lane.b32.xlu0 %v593, 127
        %v598 = vpop.permute.xlu0 %597
        %599 = vrot.lane.b32.xlu0 %v594, 127
        %v600 = vpop.permute.xlu0 %599
        %v603 = vadd.f32 %v589, %v598
        %v604 = vadd.f32 %v590, %v600
        %s605 = sld [smem:[#allocation3 + $0x14]]
        %v606 = vstv %s605
        %v607 = vmul.f32 %v584, %v606
        %v608 = vmul.f32 %v585, %v606
        %611 = vrot.lane.b32.xlu0 %v607, 126
        %v612 = vpop.permute.xlu0 %611
        %613 = vrot.lane.b32.xlu0 %v608, 126
        %v614 = vpop.permute.xlu0 %613
        %v617 = vadd.f32 %v603, %v612
        %v618 = vadd.f32 %v604, %v614
        %s619 = sld [smem:[#allocation3 + $0x15]]
        %v620 = vld [vmem:[%s583 + $0x1] sm:$0xff]
        %v621 = vld [vmem:[%s583 + $0x9] sm:$0xff]
        %v622 = vstv %s619
        %v623 = vmul.f32 %v620, %v622
        %v624 = vmul.f32 %v621, %v622
        %v625 = vadd.f32 %v617, %v623
        %v626 = vadd.f32 %v618, %v624
        %s627 = sld [smem:[#allocation3 + $0x16]]
        %v628 = vstv %s627
        %v629 = vmul.f32 %v620, %v628
        %v630 = vmul.f32 %v621, %v628
        %633 = vrot.lane.b32.xlu0 %v629, 127
        %v634 = vpop.permute.xlu0 %633
        %635 = vrot.lane.b32.xlu0 %v630, 127
        %v636 = vpop.permute.xlu0 %635
        %v639 = vadd.f32 %v625, %v634
        %v640 = vadd.f32 %v626, %v636
        %s641 = sld [smem:[#allocation3 + $0x17]]
        %v642 = vstv %s641
        %v643 = vmul.f32 %v620, %v642
        %v644 = vmul.f32 %v621, %v642
        %647 = vrot.lane.b32.xlu0 %v643, 126
        %v648 = vpop.permute.xlu0 %647
        %649 = vrot.lane.b32.xlu0 %v644, 126
        %v650 = vpop.permute.xlu0 %649
        %v653 = vadd.f32 %v639, %v648
        %v654 = vadd.f32 %v640, %v650
        %s655 = sld [smem:[#allocation3 + $0x18]]
        %v656 = vld [vmem:[%s583 + $0x2] sm:$0xff]
        %v657 = vld [vmem:[%s583 + $0xa] sm:$0xff]
        %v658 = vstv %s655
        %v659 = vmul.f32 %v656, %v658
        %v660 = vmul.f32 %v657, %v658
        %v661 = vadd.f32 %v653, %v659
        %v662 = vadd.f32 %v654, %v660
        %s663 = sld [smem:[#allocation3 + $0x19]]
        %v664 = vstv %s663
        %v665 = vmul.f32 %v656, %v664
        %v666 = vmul.f32 %v657, %v664
        %669 = vrot.lane.b32.xlu0 %v665, 127
        %v670 = vpop.permute.xlu0 %669
        %671 = vrot.lane.b32.xlu0 %v666, 127
        %v672 = vpop.permute.xlu0 %671
        %v675 = vadd.f32 %v661, %v670
        %v676 = vadd.f32 %v662, %v672
        %s677 = sld [smem:[#allocation3 + $0x1a]]
        %v678 = vstv %s677
        %v679 = vmul.f32 %v656, %v678
        %v680 = vmul.f32 %v657, %v678
        %683 = vrot.lane.b32.xlu0 %v679, 126
        %v684 = vpop.permute.xlu0 %683
        %685 = vrot.lane.b32.xlu0 %v680, 126
        %v686 = vpop.permute.xlu0 %685
        %v689 = vadd.f32 %v675, %v684
        %v690 = vadd.f32 %v676, %v686
        %s691 = sld [smem:[#allocation8 + $0x3]]
        %v692 = vstv %s691
        %v693 = vadd.f32 %v692, 0.0
        %s694 = sld [smem:[#allocation3 + $0x1b]]
        %s695 = scalar_lea.vmem [#allocation2], 72
        %v696 = vld [vmem:[%s695] sm:$0xff]
        %v697 = vld [vmem:[%s695 + $0x8] sm:$0xff]
        %v698 = vstv %s694
        %v699 = vmul.f32 %v696, %v698
        %v700 = vmul.f32 %v697, %v698
        %v701 = vadd.f32 %v693, %v699
        %v702 = vadd.f32 %v693, %v700
        %s703 = sld [smem:[#allocation3 + $0x1c]]
        %v704 = vstv %s703
        %v705 = vmul.f32 %v696, %v704
        %v706 = vmul.f32 %v697, %v704
        %709 = vrot.lane.b32.xlu0 %v705, 127
        %v710 = vpop.permute.xlu0 %709
        %711 = vrot.lane.b32.xlu0 %v706, 127
        %v712 = vpop.permute.xlu0 %711
        %v715 = vadd.f32 %v701, %v710
        %v716 = vadd.f32 %v702, %v712
        %s717 = sld [smem:[#allocation3 + $0x1d]]
        %v718 = vstv %s717
        %v719 = vmul.f32 %v696, %v718
        %v720 = vmul.f32 %v697, %v718
        %723 = vrot.lane.b32.xlu0 %v719, 126
        %v724 = vpop.permute.xlu0 %723
        %725 = vrot.lane.b32.xlu0 %v720, 126
        %v726 = vpop.permute.xlu0 %725
        %v729 = vadd.f32 %v715, %v724
        %v730 = vadd.f32 %v716, %v726
        %s731 = sld [smem:[#allocation3 + $0x1e]]
        %v732 = vld [vmem:[%s695 + $0x1] sm:$0xff]
        %v733 = vld [vmem:[%s695 + $0x9] sm:$0xff]
        %v734 = vstv %s731
        %v735 = vmul.f32 %v732, %v734
        %v736 = vmul.f32 %v733, %v734
        %v737 = vadd.f32 %v729, %v735
        %v738 = vadd.f32 %v730, %v736
        %s739 = sld [smem:[#allocation3 + $0x1f]]
        %v740 = vstv %s739
        %v741 = vmul.f32 %v732, %v740
        %v742 = vmul.f32 %v733, %v740
        %745 = vrot.lane.b32.xlu0 %v741, 127
        %v746 = vpop.permute.xlu0 %745
        %747 = vrot.lane.b32.xlu0 %v742, 127
        %v748 = vpop.permute.xlu0 %747
        %v751 = vadd.f32 %v737, %v746
        %v752 = vadd.f32 %v738, %v748
        %s753 = sld [smem:[#allocation3 + $0x20]]
        %v754 = vstv %s753
        %v755 = vmul.f32 %v732, %v754
        %v756 = vmul.f32 %v733, %v754
        %759 = vrot.lane.b32.xlu0 %v755, 126
        %v760 = vpop.permute.xlu0 %759
        %761 = vrot.lane.b32.xlu0 %v756, 126
        %v762 = vpop.permute.xlu0 %761
        %v765 = vadd.f32 %v751, %v760
        %v766 = vadd.f32 %v752, %v762
        %s767 = sld [smem:[#allocation3 + $0x21]]
        %v768 = vld [vmem:[%s695 + $0x2] sm:$0xff]
        %v769 = vld [vmem:[%s695 + $0xa] sm:$0xff]
        %v770 = vstv %s767
        %v771 = vmul.f32 %v768, %v770
        %v772 = vmul.f32 %v769, %v770
        %v773 = vadd.f32 %v765, %v771
        %v774 = vadd.f32 %v766, %v772
        %s775 = sld [smem:[#allocation3 + $0x22]]
        %v776 = vstv %s775
        %v777 = vmul.f32 %v768, %v776
        %v778 = vmul.f32 %v769, %v776
        %781 = vrot.lane.b32.xlu0 %v777, 127
        %v782 = vpop.permute.xlu0 %781
        %783 = vrot.lane.b32.xlu0 %v778, 127
        %v784 = vpop.permute.xlu0 %783
        %v787 = vadd.f32 %v773, %v782
        %v788 = vadd.f32 %v774, %v784
        %s789 = sld [smem:[#allocation3 + $0x23]]
        %v790 = vstv %s789
        %v791 = vmul.f32 %v768, %v790
        %v792 = vmul.f32 %v769, %v790
        %795 = vrot.lane.b32.xlu0 %v791, 126
        %v796 = vpop.permute.xlu0 %795
        %797 = vrot.lane.b32.xlu0 %v792, 126
        %v798 = vpop.permute.xlu0 %797
        %v801 = vadd.f32 %v787, %v796
        %v802 = vadd.f32 %v788, %v798
        %s803 = sld [smem:[#allocation11]]
        %v804 = vstv %s803
        %v805 = vadd.f32 %v804, 0.0
        %s806 = sld [smem:[#allocation9]]
        %v807 = vstv %s806
        %v808 = vmul.f32 %v465, %v807
        %v809 = vmul.f32 %v466, %v807
        %v810 = vadd.f32 %v805, %v808
        %v811 = vadd.f32 %v805, %v809
        %s812 = sld [smem:[#allocation9 + $0x1]]
        %v813 = vstv %s812
        %v814 = vmul.f32 %v577, %v813
        %v815 = vmul.f32 %v578, %v813
        %v816 = vadd.f32 %v810, %v814
        %v817 = vadd.f32 %v811, %v815
        %s818 = sld [smem:[#allocation9 + $0x2]]
        %v819 = vstv %s818
        %v820 = vmul.f32 %v689, %v819
        %v821 = vmul.f32 %v690, %v819
        %v822 = vadd.f32 %v816, %v820
        %v823 = vadd.f32 %v817, %v821
        %s824 = sld [smem:[#allocation9 + $0x3]]
        %v825 = vstv %s824
        %v826 = vmul.f32 %v801, %v825
        %v827 = vmul.f32 %v802, %v825
        %v828 = vadd.f32 %v822, %v826
        %v829 = vadd.f32 %v823, %v827
        %vm830 = vcmask 130048
        %831 = vst.msk [vmem:[%s292] sm:$0xff] %vm830, %v828
        %832 = vst.msk [vmem:[%s292 + $0x8] sm:$0xff] %vm830, %v829
        %s833 = sld [smem:[#allocation11 + $0x1]]
        %v834 = vstv %s833
        %v835 = vadd.f32 %v834, 0.0
        %s836 = sld [smem:[#allocation9 + $0x4]]
        %v837 = vstv %s836
        %v838 = vmul.f32 %v465, %v837
        %v839 = vmul.f32 %v466, %v837
        %v840 = vadd.f32 %v835, %v838
        %v841 = vadd.f32 %v835, %v839
        %s842 = sld [smem:[#allocation9 + $0x5]]
        %v843 = vstv %s842
        %v844 = vmul.f32 %v577, %v843
        %v845 = vmul.f32 %v578, %v843
        %v846 = vadd.f32 %v840, %v844
        %v847 = vadd.f32 %v841, %v845
        %s848 = sld [smem:[#allocation9 + $0x6]]
        %v849 = vstv %s848
        %v850 = vmul.f32 %v689, %v849
        %v851 = vmul.f32 %v690, %v849
        %v852 = vadd.f32 %v846, %v850
        %v853 = vadd.f32 %v847, %v851
        %s854 = sld [smem:[#allocation9 + $0x7]]
        %v855 = vstv %s854
        %v856 = vmul.f32 %v801, %v855
        %v857 = vmul.f32 %v802, %v855
        %v858 = vadd.f32 %v852, %v856
        %v859 = vadd.f32 %v853, %v857
        %s860 = scalar_lea.vmem %s292, 16 [#allocation13]
        %861 = vst.msk [vmem:[%s860] sm:$0xff] %vm830, %v858
        %862 = vst.msk [vmem:[%s860 + $0x8] sm:$0xff] %vm830, %v859
        %s863 = sld [smem:[#allocation11 + $0x2]]
        %v864 = vstv %s863
        %v865 = vadd.f32 %v864, 0.0
        %s866 = sld [smem:[#allocation9 + $0x8]]
        %v867 = vstv %s866
        %v868 = vmul.f32 %v465, %v867
        %v869 = vmul.f32 %v466, %v867
        %v870 = vadd.f32 %v865, %v868
        %v871 = vadd.f32 %v865, %v869
        %s872 = sld [smem:[#allocation9 + $0x9]]
        %v873 = vstv %s872
        %v874 = vmul.f32 %v577, %v873
        %v875 = vmul.f32 %v578, %v873
        %v876 = vadd.f32 %v870, %v874
        %v877 = vadd.f32 %v871, %v875
        %s878 = sld [smem:[#allocation9 + $0xa]]
        %v879 = vstv %s878
        %v880 = vmul.f32 %v689, %v879
        %v881 = vmul.f32 %v690, %v879
        %v882 = vadd.f32 %v876, %v880
        %v883 = vadd.f32 %v877, %v881
        %s884 = sld [smem:[#allocation9 + $0xb]]
        %v885 = vstv %s884
        %v886 = vmul.f32 %v801, %v885
        %v887 = vmul.f32 %v802, %v885
        %v888 = vadd.f32 %v882, %v886
        %v889 = vadd.f32 %v883, %v887
        %s890 = scalar_lea.vmem %s292, 32 [#allocation13]
        %891 = vst.msk [vmem:[%s890] sm:$0xff] %vm830, %v888
        %892 = vst.msk [vmem:[%s890 + $0x8] sm:$0xff] %vm830, %v889
        %s893 = sld [smem:[#allocation11 + $0x3]]
        %v894 = vstv %s893
        %v895 = vadd.f32 %v894, 0.0
        %s896 = sld [smem:[#allocation9 + $0xc]]
        %v897 = vstv %s896
        %v898 = vmul.f32 %v465, %v897
        %v899 = vmul.f32 %v466, %v897
        %v900 = vadd.f32 %v895, %v898
        %v901 = vadd.f32 %v895, %v899
        %s902 = sld [smem:[#allocation9 + $0xd]]
        %v903 = vstv %s902
        %v904 = vmul.f32 %v577, %v903
        %v905 = vmul.f32 %v578, %v903
        %v906 = vadd.f32 %v900, %v904
        %v907 = vadd.f32 %v901, %v905
        %s908 = sld [smem:[#allocation9 + $0xe]]
        %v909 = vstv %s908
        %v910 = vmul.f32 %v689, %v909
        %v911 = vmul.f32 %v690, %v909
        %v912 = vadd.f32 %v906, %v910
        %v913 = vadd.f32 %v907, %v911
        %s914 = sld [smem:[#allocation9 + $0xf]]
        %v915 = vstv %s914
        %v916 = vmul.f32 %v801, %v915
        %v917 = vmul.f32 %v802, %v915
        %v918 = vadd.f32 %v912, %v916
        %v919 = vadd.f32 %v913, %v917
        %s920 = scalar_lea.vmem %s292, 48 [#allocation13]
        %921 = vst.msk [vmem:[%s920] sm:$0xff] %vm830, %v918
        %922 = vst.msk [vmem:[%s920 + $0x8] sm:$0xff] %vm830, %v919
        %s923 = sld [smem:[#allocation11 + $0x4]]
        %v924 = vstv %s923
        %v925 = vadd.f32 %v924, 0.0
        %s926 = sld [smem:[#allocation9 + $0x10]]
        %v927 = vstv %s926
        %v928 = vmul.f32 %v465, %v927
        %v929 = vmul.f32 %v466, %v927
        %v930 = vadd.f32 %v925, %v928
        %v931 = vadd.f32 %v925, %v929
        %s932 = sld [smem:[#allocation9 + $0x11]]
        %v933 = vstv %s932
        %v934 = vmul.f32 %v577, %v933
        %v935 = vmul.f32 %v578, %v933
        %v936 = vadd.f32 %v930, %v934
        %v937 = vadd.f32 %v931, %v935
        %s938 = sld [smem:[#allocation9 + $0x12]]
        %v939 = vstv %s938
        %v940 = vmul.f32 %v689, %v939
        %v941 = vmul.f32 %v690, %v939
        %v942 = vadd.f32 %v936, %v940
        %v943 = vadd.f32 %v937, %v941
        %s944 = sld [smem:[#allocation9 + $0x13]]
        %v945 = vstv %s944
        %v946 = vmul.f32 %v801, %v945
        %v947 = vmul.f32 %v802, %v945
        %v948 = vadd.f32 %v942, %v946
        %v949 = vadd.f32 %v943, %v947
        %s950 = scalar_lea.vmem %s292, 64 [#allocation13]
        %951 = vst.msk [vmem:[%s950] sm:$0xff] %vm830, %v948
        %952 = vst.msk [vmem:[%s950 + $0x8] sm:$0xff] %vm830, %v949
        %s953 = sld [smem:[#allocation11 + $0x5]]
        %v954 = vstv %s953
        %v955 = vadd.f32 %v954, 0.0
        %s956 = sld [smem:[#allocation9 + $0x14]]
        %v957 = vstv %s956
        %v958 = vmul.f32 %v465, %v957
        %v959 = vmul.f32 %v466, %v957
        %v960 = vadd.f32 %v955, %v958
        %v961 = vadd.f32 %v955, %v959
        %s962 = sld [smem:[#allocation9 + $0x15]]
        %v963 = vstv %s962
        %v964 = vmul.f32 %v577, %v963
        %v965 = vmul.f32 %v578, %v963
        %v966 = vadd.f32 %v960, %v964
        %v967 = vadd.f32 %v961, %v965
        %s968 = sld [smem:[#allocation9 + $0x16]]
        %v969 = vstv %s968
        %v970 = vmul.f32 %v689, %v969
        %v971 = vmul.f32 %v690, %v969
        %v972 = vadd.f32 %v966, %v970
        %v973 = vadd.f32 %v967, %v971
        %s974 = sld [smem:[#allocation9 + $0x17]]
        %v975 = vstv %s974
        %v976 = vmul.f32 %v801, %v975
        %v977 = vmul.f32 %v802, %v975
        %v978 = vadd.f32 %v972, %v976
        %v979 = vadd.f32 %v973, %v977
        %s980 = scalar_lea.vmem %s292, 80 [#allocation13]
        %981 = vst.msk [vmem:[%s980] sm:$0xff] %vm830, %v978
        %982 = vst.msk [vmem:[%s980 + $0x8] sm:$0xff] %vm830, %v979
        %s983 = sld [smem:[#allocation11 + $0x6]]
        %v984 = vstv %s983
        %v985 = vadd.f32 %v984, 0.0
        %s986 = sld [smem:[#allocation9 + $0x18]]
        %v987 = vstv %s986
        %v988 = vmul.f32 %v465, %v987
        %v989 = vmul.f32 %v466, %v987
        %v990 = vadd.f32 %v985, %v988
        %v991 = vadd.f32 %v985, %v989
        %s992 = sld [smem:[#allocation9 + $0x19]]
        %v993 = vstv %s992
        %v994 = vmul.f32 %v577, %v993
        %v995 = vmul.f32 %v578, %v993
        %v996 = vadd.f32 %v990, %v994
        %v997 = vadd.f32 %v991, %v995
        %s998 = sld [smem:[#allocation9 + $0x1a]]
        %v999 = vstv %s998
        %v1000 = vmul.f32 %v689, %v999
        %v1001 = vmul.f32 %v690, %v999
        %v1002 = vadd.f32 %v996, %v1000
        %v1003 = vadd.f32 %v997, %v1001
        %s1004 = sld [smem:[#allocation9 + $0x1b]]
        %v1005 = vstv %s1004
        %v1006 = vmul.f32 %v801, %v1005
        %v1007 = vmul.f32 %v802, %v1005
        %v1008 = vadd.f32 %v1002, %v1006
        %v1009 = vadd.f32 %v1003, %v1007
        %s1010 = scalar_lea.vmem %s292, 96 [#allocation13]
        %1011 = vst.msk [vmem:[%s1010] sm:$0xff] %vm830, %v1008
        %1012 = vst.msk [vmem:[%s1010 + $0x8] sm:$0xff] %vm830, %v1009
        %s1013 = sld [smem:[#allocation11 + $0x7]]
        %v1014 = vstv %s1013
        %v1015 = vadd.f32 %v1014, 0.0
        %s1016 = sld [smem:[#allocation9 + $0x1c]]
        %v1017 = vstv %s1016
        %v1018 = vmul.f32 %v465, %v1017
        %v1019 = vmul.f32 %v466, %v1017
        %v1020 = vadd.f32 %v1015, %v1018
        %v1021 = vadd.f32 %v1015, %v1019
        %s1022 = sld [smem:[#allocation9 + $0x1d]]
        %v1023 = vstv %s1022
        %v1024 = vmul.f32 %v577, %v1023
        %v1025 = vmul.f32 %v578, %v1023
        %v1026 = vadd.f32 %v1020, %v1024
        %v1027 = vadd.f32 %v1021, %v1025
        %s1028 = sld [smem:[#allocation9 + $0x1e]]
        %v1029 = vstv %s1028
        %v1030 = vmul.f32 %v689, %v1029
        %v1031 = vmul.f32 %v690, %v1029
        %v1032 = vadd.f32 %v1026, %v1030
        %v1033 = vadd.f32 %v1027, %v1031
        %s1034 = sld [smem:[#allocation9 + $0x1f]]
        %v1035 = vstv %s1034
        %v1036 = vmul.f32 %v801, %v1035
        %v1037 = vmul.f32 %v802, %v1035
        %v1038 = vadd.f32 %v1032, %v1036
        %v1039 = vadd.f32 %v1033, %v1037
        %s1040 = scalar_lea.vmem %s292, 112 [#allocation13]
        %1041 = vst.msk [vmem:[%s1040] sm:$0xff] %vm830, %v1038
        %1042 = vst.msk [vmem:[%s1040 + $0x8] sm:$0xff] %vm830, %v1039
        %s1043 = sand.u32 %s143, 1
        %s1044 = scalar_lea.sflag [#allocation5], %s1043
        %s1045 = sand.u32 %s143, 1
        %s1046 = smul.addr %s1045, 128
        %s1047 = scalar_lea.vmem [#allocation13], %s1046
        // Predicated region
        $region61: #{tpu_custom_call.1} parent=39 // pred_check
          %p1048 = pneg %p153
        $region62: #{tpu_custom_call.1} parent=39 // pred_check_branch
          %1050 = sbr.rel (%p1048) target = $region64
        $region63: #{tpu_custom_call.1} parent=39 // pred_region
          %s1052 = ssub.s32 2048, 2048
          %1053 = vsyncadd %s1044, %s1052
          %s1054 = smul.addr %s25, 16
          %s1055 = smul.addr %s1054, 128
          %s1056 = scalar_lea.hbm %s5, %s1055
          %s1057 = sshll.u32 %s1047, 4
          %s1058 = int_to_ptr.vmem [resolvable:$true] %s1057
          %1063 = dma.vmem_to_hbm [thread:$0]  %s1058, 2048, %s1056, %s1044, 128, 128, 8
        $region64: #{tpu_custom_call.1} parent=39 // pred_fallthru
          _
      $region40: #{tpu_custom_call.1} parent=5 // pred_fallthru
        _
      %p1064 = scmp.le.s32.totalorder 2, %s20
      // Predicated region
      $region65: #{tpu_custom_call.1} parent=5 // pred_check
        %p1065 = pneg %p1064
      $region66: #{tpu_custom_call.1} parent=5 // pred_check_branch
        %1067 = sbr.rel (%p1065) target = $region68
      $region67: #{tpu_custom_call.1} parent=5 // pred_region
        %s1068 = ssub.s32 %s20, 2
        // Predicated region
        $region69: #{tpu_custom_call.1} parent=67 // pred_check
          %p1069 = pneg %p159
        $region70: #{tpu_custom_call.1} parent=67 // pred_check_branch
          %1071 = sbr.rel (%p1069) target = $region72
        $region71: #{tpu_custom_call.1} parent=67 // pred_region
          %s1072 = sand.u32 %s144, 1
          %s1073 = scalar_lea.sflag [#allocation5], %s1072
          %s1074 = sand.u32 %s144, 1
          %s1075 = smul.addr %s1074, 128
          %s1076 = scalar_lea.vmem [#allocation13], %s1075
          %1077 = dma.done %s1073, 2048
        $region72: #{tpu_custom_call.1} parent=67 // pred_fallthru
          _
      $region68: #{tpu_custom_call.1} parent=5 // pred_fallthru
        _
    $region6: #{tpu_custom_call.1} parent=1 // loop_footer
      %s24 = sadd.s32 1, %s20
    $region7: #{tpu_custom_call.1} parent=1 // loop_footer_branch
      %19 = sbr.rel target = $region3
    $region8: #{tpu_custom_call.1} parent=1 // loop_exit
      _
    %1078 = vsyncpa [#allocation4], 1
    %s1079 = scalar_lea.sflag [#allocation4], 1
    %1080 = vsyncpa %s1079, 1
    %1081 = vsyncpa [#allocation5], 1
    %s1082 = scalar_lea.sflag [#allocation5], 1
    %1083 = vsyncpa %s1082, 1
    %1084 = vsyncpa [#allocation6], 1
    %s1085 = scalar_lea.sflag [#allocation6], 1
    %1086 = vsyncpa %s1085, 1
    %1087 = vsyncpa [#allocation7], 1
    %s1088 = scalar_lea.sflag [#allocation7], 1
    %1089 = vsyncpa %s1088, 1
    %1090 = vsyncpa [#allocation10], 1

</llo_original>
